<compile_context>
chip_gen: v5e
topology: v5e:2x2
jax: 0.10.0
libtpu: 0.0.40
codegen_flags: <defaults>
</compile_context>

<pallas_src>
import functools

import jax
import jax.numpy as jnp
from jax.experimental import pallas as pl
from jax.experimental.pallas import tpu as pltpu


_WEIGHT_ORDER = (
    "wi0x", "wi0f", "b0", "wh0",
    "w_post_h0", "ba1", "wal1",
    "w_post_a1", "b1", "wh1", "be2",
    "wa2", "ba2", "wal2",
    "w_post_h1", "bf1",
    "wi2f", "wi2a", "b2", "wh2",
    "wf2c", "bf2",
)
_N_WEIGHTS = len(_WEIGHT_ORDER)


# --------------------------------------------------------------------------- #
# Fused DenseAttCore kernel (one batch tile per grid step)
# --------------------------------------------------------------------------- #
def _dense_att_core_kernel(*refs, has_mask):
    n_act = 7 if has_mask else 6
    xt_ref, fc_ref, att_ref, p_att_ref, h_in_ref, c_in_ref = refs[:6]
    mask_ref = refs[6] if has_mask else None
    (wi0x, wi0f, b0, wh0,
     w_post_h0, ba1, wal1,
     w_post_a1, b1, wh1, be2,
     wa2, ba2, wal2,
     w_post_h1, bf1,
     wi2f, wi2a, b2, wh2,
     wf2c, bf2) = refs[n_act:n_act + _N_WEIGHTS]
    out_ref, h_out_ref, c_out_ref = refs[n_act + _N_WEIGHTS:]

    R = fc_ref.shape[-1]
    H = p_att_ref.shape[-1]
    f32 = jnp.float32

    def mm(x, w_ref):
        # LHS cast to the (possibly bf16) weight dtype; accumulate in f32 (MXU).
        return jnp.dot(x.astype(w_ref.dtype), w_ref[...],
                       preferred_element_type=f32)

    def lstm_step(s, c_prev):
        # maxout LSTMCore: gates = [in, forget, out, t1, t2]; all math in f32.
        sig = jax.nn.sigmoid(s[:, 0:3 * R])
        i_g, f_g, o_g = sig[:, 0:R], sig[:, R:2 * R], sig[:, 2 * R:3 * R]
        in_t = jnp.maximum(s[:, 3 * R:4 * R], s[:, 4 * R:5 * R])
        c_new = f_g * c_prev + i_g * in_t
        h_new = o_g * jnp.tanh(c_new)
        return h_new, c_new

    # Attention features loaded once per batch tile, shared by both blocks.
    att_feats = att_ref[...]                          # (Bt, L, R) compute dtype
    att_feats_f32 = att_feats.astype(f32)
    p_att = p_att_ref[...]                            # (Bt, L, H) compute dtype
    mask = mask_ref[...] if has_mask else None        # (Bt, L) f32

    def attention(q_proj, ba_ref, wal_ref):
        # q_proj: (Bt, H) f32 query already multiplied by the h2att weight.
        att_h = (q_proj + ba_ref[...]).astype(p_att.dtype)
        # tanh over (Bt, L, H) in the compute dtype (bf16 EUP on v6e/v7x).
        dot = jnp.tanh(p_att + att_h[:, None, :])
        # alpha_net bias folded out: a constant shift before softmax is a no-op.
        scores = jnp.sum(dot.astype(f32) * wal_ref[...], axis=-1)     # (Bt, L)
        m = jnp.max(scores, axis=-1, keepdims=True)
        e = jnp.exp(scores - m)
        if has_mask:
            # softmax(s)*mask / sum(softmax(s)*mask) == e*mask / sum(e*mask)
            e = e * mask
        w = e / jnp.sum(e, axis=-1, keepdims=True)
        # Weighted sum on the VPU + sublane reduce (M=1 MXU matmul is waste).
        return jnp.sum(w[:, :, None] * att_feats_f32, axis=1)         # (Bt, R)

    # ---- lstm0 on cat([xt, fc_feats]) via split-weight matmuls --------------
    s0 = (mm(xt_ref[...], wi0x) + mm(fc_ref[...], wi0f)
          + mm(h_in_ref[0], wh0) + b0[...])
    h0, c0 = lstm_step(s0, c_in_ref[0])
    h_out_ref[0] = h0.astype(h_out_ref.dtype)
    c_out_ref[0] = c0.astype(c_out_ref.dtype)

    # ---- one N-fused matmul for everything that consumes h0 -----------------
    post_h0 = mm(h0, w_post_h0)                       # (Bt, 7R + H)
    h0_wi1h = post_h0[:, 0:5 * R]
    h0_wf1a = post_h0[:, 5 * R:6 * R]
    h0_wf2a = post_h0[:, 6 * R:7 * R]
    h0_wa1 = post_h0[:, 7 * R:7 * R + H]

    # ---- att1(h0) ------------------------------------------------------------
    att_res_1 = attention(h0_wa1, ba1, wal1)

    # ---- one N-fused matmul for everything that consumes att_res_1 ----------
    post_a1 = mm(att_res_1, w_post_a1)                # (Bt, 6R)
    a1_wi1a = post_a1[:, 0:5 * R]
    a1_we2 = post_a1[:, 5 * R:6 * R]

    # ---- lstm1 on cat([h0, att_res_1]) ---------------------------------------
    s1 = h0_wi1h + a1_wi1a + mm(h_in_ref[1], wh1) + b1[...]
    h1, c1 = lstm_step(s1, c_in_ref[1])
    h_out_ref[1] = h1.astype(h_out_ref.dtype)
    c_out_ref[1] = c1.astype(c_out_ref.dtype)

    # ---- att2(h1 + emb2(att_res_1)) ------------------------------------------
    q2 = h1 + a1_we2 + be2[...]
    att_res_2 = attention(mm(q2, wa2), ba2, wal2)

    # ---- one N-fused matmul for everything that consumes h1 -----------------
    post_h1 = mm(h1, w_post_h1)                       # (Bt, 2R)
    h1_wf1b = post_h1[:, 0:R]
    h1_wf2b = post_h1[:, R:2 * R]

    # ---- lstm2 on cat([fusion1(cat([h0, h1])), att_res_2]) -------------------
    f1 = jnp.maximum(h0_wf1a + h1_wf1b + bf1[...], 0.0)
    s2 = (mm(f1, wi2f) + mm(att_res_2, wi2a)
          + mm(h_in_ref[2], wh2) + b2[...])
    h2, c2 = lstm_step(s2, c_in_ref[2])
    h_out_ref[2] = h2.astype(h_out_ref.dtype)
    c_out_ref[2] = c2.astype(c_out_ref.dtype)

    # ---- fusion2(cat([h0, h1, h2])) + ReLU ------------------------------------
    out = jnp.maximum(h0_wf2a + h1_wf2b + mm(h2, wf2c) + bf2[...], 0.0)
    out_ref[...] = out.astype(out_ref.dtype)
    # TODO(synk): nn.Dropout in LSTMCore/fusion1/fusion2 is identity (eval mode).


# --------------------------------------------------------------------------- #
# One-time parameter preparation: split/fuse concat-weights, fold biases, cast
# --------------------------------------------------------------------------- #
def prepare_params(params, compute_dtype=jnp.float32):
    wi0, bi0, wh0, bh0 = params['lstm0']
    wi1, bi1, wh1, bh1 = params['lstm1']
    wi2, bi2, wh2, bh2 = params['lstm2']
    wa1, ba1, wal1, _bal1 = params['att1']     # alpha_net bias folded out
    wa2, ba2, wal2, _bal2 = params['att2']     # (softmax is shift-invariant)
    we2, be2 = params['emb2']
    wf1, bf1 = params['fusion1']
    wf2, bf2 = params['fusion2']

    R = wh0.shape[0]
    E = wi0.shape[0] - R
    cdt = compute_dtype
    f32 = jnp.float32

    return dict(
        # lstm0: input weight split for cat([xt, fc_feats]); biases pre-folded.
        wi0x=wi0[:E].astype(cdt), wi0f=wi0[E:].astype(cdt),
        b0=(bi0 + bh0).astype(f32), wh0=wh0.astype(cdt),
        # Everything multiplied by h0: [wi1_h | wf1_h0 | wf2_h0 | att1.h2att]
        w_post_h0=jnp.concatenate([wi1[:R], wf1[:R], wf2[:R], wa1],
                                  axis=1).astype(cdt),
        ba1=ba1.astype(f32), wal1=wal1.astype(f32),
        # Everything multiplied by att_res_1: [wi1_att | emb2]
        w_post_a1=jnp.concatenate([wi1[R:], we2], axis=1).astype(cdt),
        b1=(bi1 + bh1).astype(f32), wh1=wh1.astype(cdt), be2=be2.astype(f32),
        wa2=wa2.astype(cdt), ba2=ba2.astype(f32), wal2=wal2.astype(f32),
        # Everything multiplied by h1: [wf1_h1 | wf2_h1]
        w_post_h1=jnp.concatenate([wf1[R:], wf2[R:2 * R]], axis=1).astype(cdt),
        bf1=bf1.astype(f32),
        # lstm2: input weight split for cat([f1, att_res_2]); biases pre-folded.
        wi2f=wi2[:R].astype(cdt), wi2a=wi2[R:].astype(cdt),
        b2=(bi2 + bh2).astype(f32), wh2=wh2.astype(cdt),
        wf2c=wf2[2 * R:].astype(cdt), bf2=bf2.astype(f32),
    )
    # TODO(synk): optional int8 weight quantization for v5e/v6e (v7x MXU has no
    #   int path; use fp8 there instead).


def _vmem_limit_bytes(weights, act_inputs, n_tiles, b_tile, L, H, R):
    """Derive vmem_limit_bytes from the shapes instead of hard-coding it."""
    def nbytes(a):
        return a.size * a.dtype.itemsize
    weight_bytes = sum(nbytes(w) for w in weights)
    act_tile_bytes = sum(nbytes(a) // n_tiles for a in act_inputs)
    out_tile_bytes = 4 * (b_tile * R + 2 * 3 * b_tile * R)
    # attention / gate intermediates kept in f32
    inter_bytes = 4 * b_tile * (L * (2 * H + R) + 16 * R)
    want = (2 * weight_bytes + 2 * act_tile_bytes + 2 * out_tile_bytes
            + inter_bytes + (8 << 20))
    try:
        cap = int(pltpu.get_tpu_info().vmem_capacity_bytes)
    except Exception:
        cap = 64 * 1024 * 1024          # safe on every current generation
    return max(32 << 20, min(int(want), cap - (2 << 20)))


# --------------------------------------------------------------------------- #
# Wrapper: batch-tiled grid, resident weights, aliased state
# --------------------------------------------------------------------------- #
def dense_att_core_forward(prep, xt, fc_feats, att_feats, p_att_feats, state,
                           att_masks=None, b_tile=None):
    """One fused DenseAttCore step.  `prep` comes from prepare_params()."""
    h_in, c_in = state
    B, E = xt.shape
    R = fc_feats.shape[1]
    L = att_feats.shape[1]
    H = p_att_feats.shape[2]
    has_mask = att_masks is not None
    cdt = prep["wi0x"].dtype

    if b_tile is None:
        # f32 sublane quantum is 8, bf16 is 16; bump for production batches.
        b_tile = 16 if cdt == jnp.bfloat16 else 8
    pb = ((B + b_tile - 1) // b_tile) * b_tile
    nb = pb // b_tile

    def pad_b(x, axis=0, value=0.0):
        if pb == B:
            return x
        widths = [(0, 0)] * x.ndim
        widths[axis] = (0, pb - B)
        return jnp.pad(x, widths, constant_values=value)

    acts = [
        pad_b(xt.astype(cdt)),
        pad_b(fc_feats.astype(cdt)),
        pad_b(att_feats.astype(cdt)),
        pad_b(p_att_feats.astype(cdt)),
        pad_b(h_in.astype(jnp.float32), axis=1),      # state stays f32
        pad_b(c_in.astype(jnp.float32), axis=1),
    ]
    act_specs = [
        pl.BlockSpec((b_tile, E), lambda b: (b, 0)),
        pl.BlockSpec((b_tile, R), lambda b: (b, 0)),
        pl.BlockSpec((b_tile, L, R), lambda b: (b, 0, 0)),
        pl.BlockSpec((b_tile, L, H), lambda b: (b, 0, 0)),
        pl.BlockSpec((3, b_tile, R), lambda b: (0, b, 0)),
        pl.BlockSpec((3, b_tile, R), lambda b: (0, b, 0)),
    ]
    if has_mask:
        # Padded rows get mask == 1 so their (discarded) softmax stays finite.
        acts.append(pad_b(att_masks.reshape(B, L).astype(jnp.float32),
                          value=1.0))
        act_specs.append(pl.BlockSpec((b_tile, L), lambda b: (b, 0)))

    weights = [prep[name] for name in _WEIGHT_ORDER]
    # Constant-index BlockSpecs: the weight blocks never change across grid
    # steps, so they stay VMEM-resident instead of being re-DMA'd per tile.
    weight_specs = [
        pl.BlockSpec(w.shape, lambda b, nd=w.ndim: (0,) * nd) for w in weights
    ]

    out_shape = (
        jax.ShapeDtypeStruct((pb, R), jnp.float32),
        jax.ShapeDtypeStruct((3, pb, R), jnp.float32),
        jax.ShapeDtypeStruct((3, pb, R), jnp.float32),
    )
    out_specs = (
        pl.BlockSpec((b_tile, R), lambda b: (b, 0)),
        pl.BlockSpec((3, b_tile, R), lambda b: (0, b, 0)),
        pl.BlockSpec((3, b_tile, R), lambda b: (0, b, 0)),
    )

    # TODO(synk): for autoregressive decode, hoist the token loop into the
    #   kernel (extra "arbitrary" grid axis, h/c carried in VMEM scratch) so
    #   weights are DMA'd once per sequence instead of once per token.
    out, h_new, c_new = pl.pallas_call(
        functools.partial(_dense_att_core_kernel, has_mask=has_mask),
        grid=(nb,),
        out_shape=out_shape,
        in_specs=act_specs + weight_specs,
        out_specs=out_specs,
        # h_in -> h_out, c_in -> c_out updated in place.
        input_output_aliases={4: 1, 5: 2},
        compiler_params=pltpu.CompilerParams(
            dimension_semantics=("parallel",),   # megacore-shard batch tiles
            vmem_limit_bytes=_vmem_limit_bytes(weights, acts, nb, b_tile,
                                               L, H, R),
        ),
    )(*(acts + weights))

    if pb != B:
        out, h_new, c_new = out[:B], h_new[:, :B], c_new[:, :B]
    return out, (h_new, c_new)


# --------------------------------------------------------------------------- #
# Deterministic parameter init (shapes dictated by the module's __init__)
# --------------------------------------------------------------------------- #
def init_params(key, E, R, H):
    def lin(k, fan_in, fan_out):
        k1, k2 = jax.random.split(k)
        w = jax.random.normal(k1, (fan_in, fan_out), jnp.float32) * 0.1
        b = jax.random.normal(k2, (1, fan_out), jnp.float32) * 0.1
        return w, b

    keys = jax.random.split(key, 13)
    params = {}
    wi0, bi0 = lin(keys[0], E + R, 5 * R)
    wh0, bh0 = lin(keys[1], R, 5 * R)
    params['lstm0'] = (wi0, bi0, wh0, bh0)
    wi1, bi1 = lin(keys[2], 2 * R, 5 * R)
    wh1, bh1 = lin(keys[3], R, 5 * R)
    params['lstm1'] = (wi1, bi1, wh1, bh1)
    wi2, bi2 = lin(keys[4], 2 * R, 5 * R)
    wh2, bh2 = lin(keys[5], R, 5 * R)
    params['lstm2'] = (wi2, bi2, wh2, bh2)
    wa1, ba1 = lin(keys[6], R, H)
    walpha1, balpha1 = lin(keys[7], H, 1)
    params['att1'] = (wa1, ba1, walpha1.T, balpha1)   # alpha weight stored (1,H)
    wa2, ba2 = lin(keys[8], R, H)
    walpha2, balpha2 = lin(keys[9], H, 1)
    params['att2'] = (wa2, ba2, walpha2.T, balpha2)
    params['emb2'] = lin(keys[10], R, R)
    params['fusion1'] = lin(keys[11], 2 * R, R)
    params['fusion2'] = lin(keys[12], 3 * R, R)
    return params


# --------------------------------------------------------------------------- #
# Pure-JAX reference (straightforward port of the PyTorch module, eval mode)
# --------------------------------------------------------------------------- #
def ref_forward(params, xt, fc_feats, att_feats, p_att_feats, state,
                att_masks=None):
    h_state, c_state = state
    HI = jax.lax.Precision.HIGHEST   # accurate f32 matmuls in the reference

    def mm(a, b):
        return jnp.dot(a, b, precision=HI)

    def lstm(x, h, c, wi, bi, wh, bh):
        R = h.shape[-1]
        s = mm(x, wi) + bi + mm(h, wh) + bh
        sig = jax.nn.sigmoid(s[:, :3 * R])
        i, f, o = sig[:, :R], sig[:, R:2 * R], sig[:, 2 * R:3 * R]
        t = jnp.maximum(s[:, 3 * R:4 * R], s[:, 4 * R:5 * R])
        c_new = f * c + i * t
        return o * jnp.tanh(c_new), c_new

    def attn(h, wa, ba, walpha, balpha):
        att_h = mm(h, wa) + ba
        dot = jnp.tanh(p_att_feats + att_h[:, None, :])
        scores = jnp.sum(dot * walpha.reshape(1, 1, -1), axis=-1) + balpha
        w = jax.nn.softmax(scores, axis=-1)
        if att_masks is not None:
            w = w * att_masks
            w = w / w.sum(1, keepdims=True)
        return jnp.einsum('bl,blr->br', w, att_feats, precision=HI)

    def lin(x, w, b, relu=False):
        y = mm(x, w) + b
        return jnp.maximum(y, 0.0) if relu else y

    h0, c0 = lstm(jnp.concatenate([xt, fc_feats], 1), h_state[0], c_state[0],
                  *params['lstm0'])
    a1 = attn(h0, *params['att1'])
    h1, c1 = lstm(jnp.concatenate([h0, a1], 1), h_state[1], c_state[1],
                  *params['lstm1'])
    a2 = attn(h1 + lin(a1, *params['emb2']), *params['att2'])
    h2, c2 = lstm(jnp.concatenate([lin(jnp.concatenate([h0, h1], 1),
                                       *params['fusion1'], relu=True), a2], 1),
                  h_state[2], c_state[2], *params['lstm2'])
    out = lin(jnp.concatenate([h0, h1, h2], 1), *params['fusion2'], relu=True)
    return out, (jnp.stack([h0, h1, h2], 0), jnp.stack([c0, c1, c2], 0))


if __name__ == "__main__":
    B, E, R, H, L = 2, 16, 32, 32, 8   # batch, input_enc, rnn_size, att_hid, att_size

    key = jax.random.PRNGKey(0)
    (k_params, k_xt, k_fc, k_att, k_patt, k_h, k_c, k_m,
     k_xt2, k_fc2, k_att2, k_patt2, k_h2, k_c2, k_m2) = jax.random.split(key, 15)
    params = init_params(k_params, E, R, H)

    xt = jax.random.normal(k_xt, (B, E), jnp.float32)
    fc_feats = jax.random.normal(k_fc, (B, R), jnp.float32)
    att_feats = jax.random.normal(k_att, (B, L, R), jnp.float32)
    p_att_feats = jax.random.normal(k_patt, (B, L, H), jnp.float32)
    state = (jax.random.normal(k_h, (3, B, R), jnp.float32),
             jax.random.normal(k_c, (3, B, R), jnp.float32))
    att_masks = (jax.random.uniform(k_m, (B, L)) > 0.3).astype(jnp.float32)
    att_masks = att_masks.at[:, 0].set(1.0)      # no all-zero mask rows

    fwd = jax.jit(dense_att_core_forward, static_argnames=("b_tile",))

    def check(got, want, tol, name):
        got = jnp.asarray(got, jnp.float32)
        assert bool(jnp.all(jnp.isfinite(got))), f"{name}: non-finite values"
        assert jnp.allclose(got, want, atol=tol, rtol=tol), (
            f"{name} mismatch: max abs err "
            f"{float(jnp.max(jnp.abs(got - want)))}")

    # ---- f32 path, no mask ---------------------------------------------------
    prep_f32 = prepare_params(params, jnp.float32)
    out, (h_new, c_new) = fwd(prep_f32, xt, fc_feats, att_feats, p_att_feats,
                              state)
    jax.block_until_ready((out, h_new, c_new))
    assert out.shape == (B, R)
    assert h_new.shape == (3, B, R) and c_new.shape == (3, B, R)
    r_out, (r_h, r_c) = ref_forward(params, xt, fc_feats, att_feats,
                                    p_att_feats, state)
    # Tolerance covers default-precision MXU f32 matmul passes.
    check(out, r_out, 2e-2, "out[f32]")
    check(h_new, r_h, 2e-2, "h[f32]")
    check(c_new, r_c, 2e-2, "c[f32]")

    # ---- f32 path, with attention mask ---------------------------------------
    out_m, (h_m, c_m) = fwd(prep_f32, xt, fc_feats, att_feats, p_att_feats,
                            state, att_masks)
    jax.block_until_ready(out_m)
    r_out_m, (r_h_m, r_c_m) = ref_forward(params, xt, fc_feats, att_feats,
                                          p_att_feats, state, att_masks)
    check(out_m, r_out_m, 2e-2, "out[f32,mask]")
    check(h_m, r_h_m, 2e-2, "h[f32,mask]")
    check(c_m, r_c_m, 2e-2, "c[f32,mask]")

    # ---- bf16 path, masked, batch big enough for a multi-tile grid ------------
    B2 = 20
    xt2 = jax.random.normal(k_xt2, (B2, E), jnp.float32)
    fc2 = jax.random.normal(k_fc2, (B2, R), jnp.float32)
    att2 = jax.random.normal(k_att2, (B2, L, R), jnp.float32)
    patt2 = jax.random.normal(k_patt2, (B2, L, H), jnp.float32)
    state2 = (jax.random.normal(k_h2, (3, B2, R), jnp.float32),
              jax.random.normal(k_c2, (3, B2, R), jnp.float32))
    mask2 = (jax.random.uniform(k_m2, (B2, L)) > 0.3).astype(jnp.float32)
    mask2 = mask2.at[:, 0].set(1.0)

    prep_bf16 = prepare_params(params, jnp.bfloat16)
    out2, (h_new2, c_new2) = fwd(prep_bf16, xt2, fc2, att2, patt2, state2,
                                 mask2)
    jax.block_until_ready(out2)
    r_out2, (r_h2, r_c2) = ref_forward(params, xt2, fc2, att2, patt2, state2,
                                       mask2)
    check(out2, r_out2, 1e-1, "out[bf16]")
    check(h_new2, r_h2, 1e-1, "h[bf16]")
    check(c_new2, r_c2, 1e-1, "c[bf16]")

    print("KERNEL_OK")
</pallas_src>

<mosaic_0001>
module attributes {stable_mosaic.version = 11 : i64} {
  func.func @_dense_att_core_kernel(%arg0: i32, %arg1: memref<8x16xf32, #tpu.memory_space<vmem>>, %arg2: memref<8x32xf32, #tpu.memory_space<vmem>>, %arg3: memref<8x8x32xf32, #tpu.memory_space<vmem>>, %arg4: memref<8x8x32xf32, #tpu.memory_space<vmem>>, %arg5: memref<3x8x32xf32, #tpu.memory_space<vmem>>, %arg6: memref<3x8x32xf32, #tpu.memory_space<vmem>>, %arg7: memref<16x160xf32, #tpu.memory_space<vmem>>, %arg8: memref<32x160xf32, #tpu.memory_space<vmem>>, %arg9: memref<1x160xf32, #tpu.memory_space<vmem>>, %arg10: memref<32x160xf32, #tpu.memory_space<vmem>>, %arg11: memref<32x256xf32, #tpu.memory_space<vmem>>, %arg12: memref<1x32xf32, #tpu.memory_space<vmem>>, %arg13: memref<1x32xf32, #tpu.memory_space<vmem>>, %arg14: memref<32x192xf32, #tpu.memory_space<vmem>>, %arg15: memref<1x160xf32, #tpu.memory_space<vmem>>, %arg16: memref<32x160xf32, #tpu.memory_space<vmem>>, %arg17: memref<1x32xf32, #tpu.memory_space<vmem>>, %arg18: memref<32x32xf32, #tpu.memory_space<vmem>>, %arg19: memref<1x32xf32, #tpu.memory_space<vmem>>, %arg20: memref<1x32xf32, #tpu.memory_space<vmem>>, %arg21: memref<32x64xf32, #tpu.memory_space<vmem>>, %arg22: memref<1x32xf32, #tpu.memory_space<vmem>>, %arg23: memref<32x160xf32, #tpu.memory_space<vmem>>, %arg24: memref<32x160xf32, #tpu.memory_space<vmem>>, %arg25: memref<1x160xf32, #tpu.memory_space<vmem>>, %arg26: memref<32x160xf32, #tpu.memory_space<vmem>>, %arg27: memref<32x32xf32, #tpu.memory_space<vmem>>, %arg28: memref<1x32xf32, #tpu.memory_space<vmem>>, %arg29: memref<8x32xf32, #tpu.memory_space<vmem>>, %arg30: memref<3x8x32xf32, #tpu.memory_space<vmem>>, %arg31: memref<3x8x32xf32, #tpu.memory_space<vmem>>) attributes {dimension_semantics = [#tpu.dimension_semantics<parallel>], iteration_bounds = array<i64: 1>, scalar_prefetch = 0 : i64, scratch_operands = 0 : i64, tpu.core_type = #tpu.core_type<tc>, window_params = [{transform_indices = @transform_0, window_bounds = array<i64: 8, 16>}, {transform_indices = @transform_1, window_bounds = array<i64: 8, 32>}, {transform_indices = @transform_2, window_bounds = array<i64: 8, 8, 32>}, {transform_indices = @transform_3, window_bounds = array<i64: 8, 8, 32>}, {transform_indices = @transform_4, window_bounds = array<i64: 3, 8, 32>}, {transform_indices = @transform_5, window_bounds = array<i64: 3, 8, 32>}, {pipeline_mode = #tpu.pipeline_mode<synchronous>, transform_indices = @transform_6, window_bounds = array<i64: 16, 160>}, {pipeline_mode = #tpu.pipeline_mode<synchronous>, transform_indices = @transform_7, window_bounds = array<i64: 32, 160>}, {pipeline_mode = #tpu.pipeline_mode<synchronous>, transform_indices = @transform_8, window_bounds = array<i64: 1, 160>}, {pipeline_mode = #tpu.pipeline_mode<synchronous>, transform_indices = @transform_9, window_bounds = array<i64: 32, 160>}, {pipeline_mode = #tpu.pipeline_mode<synchronous>, transform_indices = @transform_10, window_bounds = array<i64: 32, 256>}, {pipeline_mode = #tpu.pipeline_mode<synchronous>, transform_indices = @transform_11, window_bounds = array<i64: 1, 32>}, {pipeline_mode = #tpu.pipeline_mode<synchronous>, transform_indices = @transform_12, window_bounds = array<i64: 1, 32>}, {pipeline_mode = #tpu.pipeline_mode<synchronous>, transform_indices = @transform_13, window_bounds = array<i64: 32, 192>}, {pipeline_mode = #tpu.pipeline_mode<synchronous>, transform_indices = @transform_14, window_bounds = array<i64: 1, 160>}, {pipeline_mode = #tpu.pipeline_mode<synchronous>, transform_indices = @transform_15, window_bounds = array<i64: 32, 160>}, {pipeline_mode = #tpu.pipeline_mode<synchronous>, transform_indices = @transform_16, window_bounds = array<i64: 1, 32>}, {pipeline_mode = #tpu.pipeline_mode<synchronous>, transform_indices = @transform_17, window_bounds = array<i64: 32, 32>}, {pipeline_mode = #tpu.pipeline_mode<synchronous>, transform_indices = @transform_18, window_bounds = array<i64: 1, 32>}, {pipeline_mode = #tpu.pipeline_mode<synchronous>, transform_indices = @transform_19, window_bounds = array<i64: 1, 32>}, {pipeline_mode = #tpu.pipeline_mode<synchronous>, transform_indices = @transform_20, window_bounds = array<i64: 32, 64>}, {pipeline_mode = #tpu.pipeline_mode<synchronous>, transform_indices = @transform_21, window_bounds = array<i64: 1, 32>}, {pipeline_mode = #tpu.pipeline_mode<synchronous>, transform_indices = @transform_22, window_bounds = array<i64: 32, 160>}, {pipeline_mode = #tpu.pipeline_mode<synchronous>, transform_indices = @transform_23, window_bounds = array<i64: 32, 160>}, {pipeline_mode = #tpu.pipeline_mode<synchronous>, transform_indices = @transform_24, window_bounds = array<i64: 1, 160>}, {pipeline_mode = #tpu.pipeline_mode<synchronous>, transform_indices = @transform_25, window_bounds = array<i64: 32, 160>}, {pipeline_mode = #tpu.pipeline_mode<synchronous>, transform_indices = @transform_26, window_bounds = array<i64: 32, 32>}, {pipeline_mode = #tpu.pipeline_mode<synchronous>, transform_indices = @transform_27, window_bounds = array<i64: 1, 32>}, {transform_indices = @transform_28, window_bounds = array<i64: 8, 32>}, {transform_indices = @transform_29, window_bounds = array<i64: 3, 8, 32>}, {transform_indices = @transform_30, window_bounds = array<i64: 3, 8, 32>}]} {
    %c0 = arith.constant 0 : index
    %c0_0 = arith.constant 0 : index
    %c0_1 = arith.constant 0 : index
    %0 = vector.load %arg3[%c0, %c0_0, %c0_1] : memref<8x8x32xf32, #tpu.memory_space<vmem>>, vector<8x8x32xf32>
    %c0_2 = arith.constant 0 : index
    %c0_3 = arith.constant 0 : index
    %c0_4 = arith.constant 0 : index
    %1 = vector.load %arg4[%c0_2, %c0_3, %c0_4] : memref<8x8x32xf32, #tpu.memory_space<vmem>>, vector<8x8x32xf32>
    %c0_5 = arith.constant 0 : index
    %c0_6 = arith.constant 0 : index
    %2 = vector.load %arg1[%c0_5, %c0_6] : memref<8x16xf32, #tpu.memory_space<vmem>>, vector<8x16xf32>
    %c0_7 = arith.constant 0 : index
    %c0_8 = arith.constant 0 : index
    %3 = vector.load %arg7[%c0_7, %c0_8] : memref<16x160xf32, #tpu.memory_space<vmem>>, vector<16x160xf32>
    %cst = arith.constant dense<0.000000e+00> : vector<8x160xf32>
    %4 = tpu.matmul %2, %3, %cst {dimension_numbers = #tpu.dot_dimension_numbers<[1], [0], [0], [1], [0, 0, 1, 1], [], []>} : vector<8x16xf32>, vector<16x160xf32>, vector<8x160xf32> -> vector<8x160xf32>
    %c0_9 = arith.constant 0 : index
    %c0_10 = arith.constant 0 : index
    %5 = vector.load %arg2[%c0_9, %c0_10] : memref<8x32xf32, #tpu.memory_space<vmem>>, vector<8x32xf32>
    %c0_11 = arith.constant 0 : index
    %c0_12 = arith.constant 0 : index
    %6 = vector.load %arg8[%c0_11, %c0_12] : memref<32x160xf32, #tpu.memory_space<vmem>>, vector<32x160xf32>
    %cst_13 = arith.constant dense<0.000000e+00> : vector<8x160xf32>
    %7 = tpu.matmul %5, %6, %cst_13 {dimension_numbers = #tpu.dot_dimension_numbers<[1], [0], [0], [1], [0, 0, 1, 1], [], []>} : vector<8x32xf32>, vector<32x160xf32>, vector<8x160xf32> -> vector<8x160xf32>
    %8 = arith.addf %4, %7 : vector<8x160xf32>
    %c0_14 = arith.constant 0 : index
    %c0_15 = arith.constant 0 : index
    %c0_16 = arith.constant 0 : index
    %9 = vector.load %arg5[%c0_14, %c0_15, %c0_16] : memref<3x8x32xf32, #tpu.memory_space<vmem>>, vector<1x8x32xf32>
    %10 = vector.shape_cast %9 : vector<1x8x32xf32> to vector<8x32xf32>
    %c0_17 = arith.constant 0 : index
    %c0_18 = arith.constant 0 : index
    %11 = vector.load %arg10[%c0_17, %c0_18] : memref<32x160xf32, #tpu.memory_space<vmem>>, vector<32x160xf32>
    %cst_19 = arith.constant dense<0.000000e+00> : vector<8x160xf32>
    %12 = tpu.matmul %10, %11, %cst_19 {dimension_numbers = #tpu.dot_dimension_numbers<[1], [0], [0], [1], [0, 0, 1, 1], [], []>} : vector<8x32xf32>, vector<32x160xf32>, vector<8x160xf32> -> vector<8x160xf32>
    %13 = arith.addf %8, %12 : vector<8x160xf32>
    %c0_20 = arith.constant 0 : index
    %c0_21 = arith.constant 0 : index
    %14 = vector.load %arg9[%c0_20, %c0_21] : memref<1x160xf32, #tpu.memory_space<vmem>>, vector<1x160xf32>
    %15 = vector.broadcast %14 : vector<1x160xf32> to vector<8x160xf32>
    %16 = arith.addf %13, %15 : vector<8x160xf32>
    %c0_22 = arith.constant 0 : index
    %c0_23 = arith.constant 0 : index
    %c0_24 = arith.constant 0 : index
    %17 = vector.load %arg6[%c0_22, %c0_23, %c0_24] : memref<3x8x32xf32, #tpu.memory_space<vmem>>, vector<1x8x32xf32>
    %18 = vector.shape_cast %17 : vector<1x8x32xf32> to vector<8x32xf32>
    %19 = vector.extract_strided_slice %16 {offsets = [0, 0], sizes = [8, 96], strides = [1, 1]} : vector<8x160xf32> to vector<8x96xf32>
    %20 = arith.negf %19 : vector<8x96xf32>
    %21 = math.exp %20 : vector<8x96xf32>
    %cst_25 = arith.constant 1.000000e+00 : f32
    %22 = vector.broadcast %cst_25 : f32 to vector<8x96xf32>
    %23 = arith.addf %22, %21 : vector<8x96xf32>
    %24 = arith.divf %22, %23 : vector<8x96xf32>
    %25 = vector.extract_strided_slice %24 {offsets = [0, 0], sizes = [8, 32], strides = [1, 1]} : vector<8x96xf32> to vector<8x32xf32>
    %26 = vector.extract_strided_slice %24 {offsets = [0, 32], sizes = [8, 32], strides = [1, 1]} : vector<8x96xf32> to vector<8x32xf32>
    %27 = vector.extract_strided_slice %24 {offsets = [0, 64], sizes = [8, 32], strides = [1, 1]} : vector<8x96xf32> to vector<8x32xf32>
    %28 = vector.extract_strided_slice %16 {offsets = [0, 96], sizes = [8, 32], strides = [1, 1]} : vector<8x160xf32> to vector<8x32xf32>
    %29 = vector.extract_strided_slice %16 {offsets = [0, 128], sizes = [8, 32], strides = [1, 1]} : vector<8x160xf32> to vector<8x32xf32>
    %30 = arith.maximumf %28, %29 : vector<8x32xf32>
    %31 = arith.mulf %26, %18 : vector<8x32xf32>
    %32 = arith.mulf %25, %30 : vector<8x32xf32>
    %33 = arith.addf %31, %32 : vector<8x32xf32>
    %34 = math.tanh %33 : vector<8x32xf32>
    %35 = arith.mulf %27, %34 : vector<8x32xf32>
    %c0_26 = arith.constant 0 : index
    %c0_27 = arith.constant 0 : index
    %c0_28 = arith.constant 0 : index
    %36 = vector.load %arg30[%c0_26, %c0_27, %c0_28] : memref<3x8x32xf32, #tpu.memory_space<vmem>>, vector<1x8x32xf32>
    %37 = vector.shape_cast %36 : vector<1x8x32xf32> to vector<8x32xf32>
    %38 = vector.shape_cast %35 : vector<8x32xf32> to vector<1x8x32xf32>
    tpu.vector_store %arg30[%c0_26, %c0_27, %c0_28], %38 {strides = array<i32>} : memref<3x8x32xf32, #tpu.memory_space<vmem>>, vector<1x8x32xf32>,
    %c0_29 = arith.constant 0 : index
    %c0_30 = arith.constant 0 : index
    %c0_31 = arith.constant 0 : index
    %39 = vector.load %arg31[%c0_29, %c0_30, %c0_31] : memref<3x8x32xf32, #tpu.memory_space<vmem>>, vector<1x8x32xf32>
    %40 = vector.shape_cast %39 : vector<1x8x32xf32> to vector<8x32xf32>
    %41 = vector.shape_cast %33 : vector<8x32xf32> to vector<1x8x32xf32>
    tpu.vector_store %arg31[%c0_29, %c0_30, %c0_31], %41 {strides = array<i32>} : memref<3x8x32xf32, #tpu.memory_space<vmem>>, vector<1x8x32xf32>,
    %c0_32 = arith.constant 0 : index
    %c0_33 = arith.constant 0 : index
    %42 = vector.load %arg11[%c0_32, %c0_33] : memref<32x256xf32, #tpu.memory_space<vmem>>, vector<32x256xf32>
    %cst_34 = arith.constant dense<0.000000e+00> : vector<8x256xf32>
    %43 = tpu.matmul %35, %42, %cst_34 {dimension_numbers = #tpu.dot_dimension_numbers<[1], [0], [0], [1], [0, 0, 1, 1], [], []>} : vector<8x32xf32>, vector<32x256xf32>, vector<8x256xf32> -> vector<8x256xf32>
    %44 = vector.extract_strided_slice %43 {offsets = [0, 0], sizes = [8, 160], strides = [1, 1]} : vector<8x256xf32> to vector<8x160xf32>
    %45 = vector.extract_strided_slice %43 {offsets = [0, 160], sizes = [8, 32], strides = [1, 1]} : vector<8x256xf32> to vector<8x32xf32>
    %46 = vector.extract_strided_slice %43 {offsets = [0, 192], sizes = [8, 32], strides = [1, 1]} : vector<8x256xf32> to vector<8x32xf32>
    %47 = vector.extract_strided_slice %43 {offsets = [0, 224], sizes = [8, 32], strides = [1, 1]} : vector<8x256xf32> to vector<8x32xf32>
    %c0_35 = arith.constant 0 : index
    %c0_36 = arith.constant 0 : index
    %48 = vector.load %arg12[%c0_35, %c0_36] : memref<1x32xf32, #tpu.memory_space<vmem>>, vector<1x32xf32>
    %49 = vector.broadcast %48 : vector<1x32xf32> to vector<8x32xf32>
    %50 = arith.addf %47, %49 : vector<8x32xf32>
    %51 = vector.shape_cast %50 : vector<8x32xf32> to vector<8x1x32xf32>
    %52 = vector.broadcast %51 : vector<8x1x32xf32> to vector<8x8x32xf32>
    %53 = arith.addf %1, %52 : vector<8x8x32xf32>
    %54 = math.tanh %53 : vector<8x8x32xf32>
    %c0_37 = arith.constant 0 : index
    %c0_38 = arith.constant 0 : index
    %55 = vector.load %arg13[%c0_37, %c0_38] : memref<1x32xf32, #tpu.memory_space<vmem>>, vector<1x32xf32>
    %56 = vector.shape_cast %55 : vector<1x32xf32> to vector<1x1x32xf32>
    %57 = vector.broadcast %56 : vector<1x1x32xf32> to vector<8x8x32xf32>
    %58 = arith.mulf %54, %57 : vector<8x8x32xf32>
    %cst_39 = arith.constant dense<0.000000e+00> : vector<8x8xf32>
    %59 = vector.multi_reduction <add>, %58, %cst_39 [2] : vector<8x8x32xf32> to vector<8x8xf32>
    %cst_40 = arith.constant dense<0xFF800000> : vector<8xf32>
    %60 = vector.multi_reduction <maximumf>, %59, %cst_40 [1] : vector<8x8xf32> to vector<8xf32>
    %61 = vector.shape_cast %60 : vector<8xf32> to vector<8x1xf32>
    %62 = vector.broadcast %61 : vector<8x1xf32> to vector<8x8xf32>
    %63 = arith.subf %59, %62 : vector<8x8xf32>
    %64 = math.exp %63 : vector<8x8xf32>
    %cst_41 = arith.constant dense<0.000000e+00> : vector<8xf32>
    %65 = vector.multi_reduction <add>, %64, %cst_41 [1] : vector<8x8xf32> to vector<8xf32>
    %66 = vector.shape_cast %65 : vector<8xf32> to vector<8x1xf32>
    %67 = vector.broadcast %66 : vector<8x1xf32> to vector<8x8xf32>
    %68 = arith.divf %64, %67 : vector<8x8xf32>
    %69 = vector.shape_cast %68 : vector<8x8xf32> to vector<8x8x1xf32>
    %70 = vector.broadcast %69 : vector<8x8x1xf32> to vector<8x8x32xf32>
    %71 = arith.mulf %70, %0 : vector<8x8x32xf32>
    %cst_42 = arith.constant dense<0.000000e+00> : vector<8x32xf32>
    %72 = vector.multi_reduction <add>, %71, %cst_42 [1] : vector<8x8x32xf32> to vector<8x32xf32>
    %c0_43 = arith.constant 0 : index
    %c0_44 = arith.constant 0 : index
    %73 = vector.load %arg14[%c0_43, %c0_44] : memref<32x192xf32, #tpu.memory_space<vmem>>, vector<32x192xf32>
    %cst_45 = arith.constant dense<0.000000e+00> : vector<8x192xf32>
    %74 = tpu.matmul %72, %73, %cst_45 {dimension_numbers = #tpu.dot_dimension_numbers<[1], [0], [0], [1], [0, 0, 1, 1], [], []>} : vector<8x32xf32>, vector<32x192xf32>, vector<8x192xf32> -> vector<8x192xf32>
    %75 = vector.extract_strided_slice %74 {offsets = [0, 0], sizes = [8, 160], strides = [1, 1]} : vector<8x192xf32> to vector<8x160xf32>
    %76 = vector.extract_strided_slice %74 {offsets = [0, 160], sizes = [8, 32], strides = [1, 1]} : vector<8x192xf32> to vector<8x32xf32>
    %77 = arith.addf %44, %75 : vector<8x160xf32>
    %c1 = arith.constant 1 : index
    %c0_46 = arith.constant 0 : index
    %c0_47 = arith.constant 0 : index
    %78 = vector.load %arg5[%c1, %c0_46, %c0_47] : memref<3x8x32xf32, #tpu.memory_space<vmem>>, vector<1x8x32xf32>
    %79 = vector.shape_cast %78 : vector<1x8x32xf32> to vector<8x32xf32>
    %c0_48 = arith.constant 0 : index
    %c0_49 = arith.constant 0 : index
    %80 = vector.load %arg16[%c0_48, %c0_49] : memref<32x160xf32, #tpu.memory_space<vmem>>, vector<32x160xf32>
    %cst_50 = arith.constant dense<0.000000e+00> : vector<8x160xf32>
    %81 = tpu.matmul %79, %80, %cst_50 {dimension_numbers = #tpu.dot_dimension_numbers<[1], [0], [0], [1], [0, 0, 1, 1], [], []>} : vector<8x32xf32>, vector<32x160xf32>, vector<8x160xf32> -> vector<8x160xf32>
    %82 = arith.addf %77, %81 : vector<8x160xf32>
    %c0_51 = arith.constant 0 : index
    %c0_52 = arith.constant 0 : index
    %83 = vector.load %arg15[%c0_51, %c0_52] : memref<1x160xf32, #tpu.memory_space<vmem>>, vector<1x160xf32>
    %84 = vector.broadcast %83 : vector<1x160xf32> to vector<8x160xf32>
    %85 = arith.addf %82, %84 : vector<8x160xf32>
    %c1_53 = arith.constant 1 : index
    %c0_54 = arith.constant 0 : index
    %c0_55 = arith.constant 0 : index
    %86 = vector.load %arg6[%c1_53, %c0_54, %c0_55] : memref<3x8x32xf32, #tpu.memory_space<vmem>>, vector<1x8x32xf32>
    %87 = vector.shape_cast %86 : vector<1x8x32xf32> to vector<8x32xf32>
    %88 = vector.extract_strided_slice %85 {offsets = [0, 0], sizes = [8, 96], strides = [1, 1]} : vector<8x160xf32> to vector<8x96xf32>
    %89 = arith.negf %88 : vector<8x96xf32>
    %90 = math.exp %89 : vector<8x96xf32>
    %cst_56 = arith.constant 1.000000e+00 : f32
    %91 = vector.broadcast %cst_56 : f32 to vector<8x96xf32>
    %92 = arith.addf %91, %90 : vector<8x96xf32>
    %93 = arith.divf %91, %92 : vector<8x96xf32>
    %94 = vector.extract_strided_slice %93 {offsets = [0, 0], sizes = [8, 32], strides = [1, 1]} : vector<8x96xf32> to vector<8x32xf32>
    %95 = vector.extract_strided_slice %93 {offsets = [0, 32], sizes = [8, 32], strides = [1, 1]} : vector<8x96xf32> to vector<8x32xf32>
    %96 = vector.extract_strided_slice %93 {offsets = [0, 64], sizes = [8, 32], strides = [1, 1]} : vector<8x96xf32> to vector<8x32xf32>
    %97 = vector.extract_strided_slice %85 {offsets = [0, 96], sizes = [8, 32], strides = [1, 1]} : vector<8x160xf32> to vector<8x32xf32>
    %98 = vector.extract_strided_slice %85 {offsets = [0, 128], sizes = [8, 32], strides = [1, 1]} : vector<8x160xf32> to vector<8x32xf32>
    %99 = arith.maximumf %97, %98 : vector<8x32xf32>
    %100 = arith.mulf %95, %87 : vector<8x32xf32>
    %101 = arith.mulf %94, %99 : vector<8x32xf32>
    %102 = arith.addf %100, %101 : vector<8x32xf32>
    %103 = math.tanh %102 : vector<8x32xf32>
    %104 = arith.mulf %96, %103 : vector<8x32xf32>
    %c1_57 = arith.constant 1 : index
    %c0_58 = arith.constant 0 : index
    %c0_59 = arith.constant 0 : index
    %105 = vector.load %arg30[%c1_57, %c0_58, %c0_59] : memref<3x8x32xf32, #tpu.memory_space<vmem>>, vector<1x8x32xf32>
    %106 = vector.shape_cast %105 : vector<1x8x32xf32> to vector<8x32xf32>
    %107 = vector.shape_cast %104 : vector<8x32xf32> to vector<1x8x32xf32>
    tpu.vector_store %arg30[%c1_57, %c0_58, %c0_59], %107 {strides = array<i32>} : memref<3x8x32xf32, #tpu.memory_space<vmem>>, vector<1x8x32xf32>,
    %c1_60 = arith.constant 1 : index
    %c0_61 = arith.constant 0 : index
    %c0_62 = arith.constant 0 : index
    %108 = vector.load %arg31[%c1_60, %c0_61, %c0_62] : memref<3x8x32xf32, #tpu.memory_space<vmem>>, vector<1x8x32xf32>
    %109 = vector.shape_cast %108 : vector<1x8x32xf32> to vector<8x32xf32>
    %110 = vector.shape_cast %102 : vector<8x32xf32> to vector<1x8x32xf32>
    tpu.vector_store %arg31[%c1_60, %c0_61, %c0_62], %110 {strides = array<i32>} : memref<3x8x32xf32, #tpu.memory_space<vmem>>, vector<1x8x32xf32>,
    %111 = arith.addf %104, %76 : vector<8x32xf32>
    %c0_63 = arith.constant 0 : index
    %c0_64 = arith.constant 0 : index
    %112 = vector.load %arg17[%c0_63, %c0_64] : memref<1x32xf32, #tpu.memory_space<vmem>>, vector<1x32xf32>
    %113 = vector.broadcast %112 : vector<1x32xf32> to vector<8x32xf32>
    %114 = arith.addf %111, %113 : vector<8x32xf32>
    %c0_65 = arith.constant 0 : index
    %c0_66 = arith.constant 0 : index
    %115 = vector.load %arg18[%c0_65, %c0_66] : memref<32x32xf32, #tpu.memory_space<vmem>>, vector<32x32xf32>
    %cst_67 = arith.constant dense<0.000000e+00> : vector<8x32xf32>
    %116 = tpu.matmul %114, %115, %cst_67 {dimension_numbers = #tpu.dot_dimension_numbers<[1], [0], [0], [1], [0, 0, 1, 1], [], []>} : vector<8x32xf32>, vector<32x32xf32>, vector<8x32xf32> -> vector<8x32xf32>
    %c0_68 = arith.constant 0 : index
    %c0_69 = arith.constant 0 : index
    %117 = vector.load %arg19[%c0_68, %c0_69] : memref<1x32xf32, #tpu.memory_space<vmem>>, vector<1x32xf32>
    %118 = vector.broadcast %117 : vector<1x32xf32> to vector<8x32xf32>
    %119 = arith.addf %116, %118 : vector<8x32xf32>
    %120 = vector.shape_cast %119 : vector<8x32xf32> to vector<8x1x32xf32>
    %121 = vector.broadcast %120 : vector<8x1x32xf32> to vector<8x8x32xf32>
    %122 = arith.addf %1, %121 : vector<8x8x32xf32>
    %123 = math.tanh %122 : vector<8x8x32xf32>
    %c0_70 = arith.constant 0 : index
    %c0_71 = arith.constant 0 : index
    %124 = vector.load %arg20[%c0_70, %c0_71] : memref<1x32xf32, #tpu.memory_space<vmem>>, vector<1x32xf32>
    %125 = vector.shape_cast %124 : vector<1x32xf32> to vector<1x1x32xf32>
    %126 = vector.broadcast %125 : vector<1x1x32xf32> to vector<8x8x32xf32>
    %127 = arith.mulf %123, %126 : vector<8x8x32xf32>
    %cst_72 = arith.constant dense<0.000000e+00> : vector<8x8xf32>
    %128 = vector.multi_reduction <add>, %127, %cst_72 [2] : vector<8x8x32xf32> to vector<8x8xf32>
    %cst_73 = arith.constant dense<0xFF800000> : vector<8xf32>
    %129 = vector.multi_reduction <maximumf>, %128, %cst_73 [1] : vector<8x8xf32> to vector<8xf32>
    %130 = vector.shape_cast %129 : vector<8xf32> to vector<8x1xf32>
    %131 = vector.broadcast %130 : vector<8x1xf32> to vector<8x8xf32>
    %132 = arith.subf %128, %131 : vector<8x8xf32>
    %133 = math.exp %132 : vector<8x8xf32>
    %cst_74 = arith.constant dense<0.000000e+00> : vector<8xf32>
    %134 = vector.multi_reduction <add>, %133, %cst_74 [1] : vector<8x8xf32> to vector<8xf32>
    %135 = vector.shape_cast %134 : vector<8xf32> to vector<8x1xf32>
    %136 = vector.broadcast %135 : vector<8x1xf32> to vector<8x8xf32>
    %137 = arith.divf %133, %136 : vector<8x8xf32>
    %138 = vector.shape_cast %137 : vector<8x8xf32> to vector<8x8x1xf32>
    %139 = vector.broadcast %138 : vector<8x8x1xf32> to vector<8x8x32xf32>
    %140 = arith.mulf %139, %0 : vector<8x8x32xf32>
    %cst_75 = arith.constant dense<0.000000e+00> : vector<8x32xf32>
    %141 = vector.multi_reduction <add>, %140, %cst_75 [1] : vector<8x8x32xf32> to vector<8x32xf32>
    %c0_76 = arith.constant 0 : index
    %c0_77 = arith.constant 0 : index
    %142 = vector.load %arg21[%c0_76, %c0_77] : memref<32x64xf32, #tpu.memory_space<vmem>>, vector<32x64xf32>
    %cst_78 = arith.constant dense<0.000000e+00> : vector<8x64xf32>
    %143 = tpu.matmul %104, %142, %cst_78 {dimension_numbers = #tpu.dot_dimension_numbers<[1], [0], [0], [1], [0, 0, 1, 1], [], []>} : vector<8x32xf32>, vector<32x64xf32>, vector<8x64xf32> -> vector<8x64xf32>
    %144 = vector.extract_strided_slice %143 {offsets = [0, 0], sizes = [8, 32], strides = [1, 1]} : vector<8x64xf32> to vector<8x32xf32>
    %145 = vector.extract_strided_slice %143 {offsets = [0, 32], sizes = [8, 32], strides = [1, 1]} : vector<8x64xf32> to vector<8x32xf32>
    %146 = arith.addf %45, %144 : vector<8x32xf32>
    %c0_79 = arith.constant 0 : index
    %c0_80 = arith.constant 0 : index
    %147 = vector.load %arg22[%c0_79, %c0_80] : memref<1x32xf32, #tpu.memory_space<vmem>>, vector<1x32xf32>
    %148 = vector.broadcast %147 : vector<1x32xf32> to vector<8x32xf32>
    %149 = arith.addf %146, %148 : vector<8x32xf32>
    %cst_81 = arith.constant 0.000000e+00 : f32
    %150 = vector.broadcast %cst_81 : f32 to vector<8x32xf32>
    %151 = arith.maximumf %149, %150 : vector<8x32xf32>
    %c0_82 = arith.constant 0 : index
    %c0_83 = arith.constant 0 : index
    %152 = vector.load %arg23[%c0_82, %c0_83] : memref<32x160xf32, #tpu.memory_space<vmem>>, vector<32x160xf32>
    %cst_84 = arith.constant dense<0.000000e+00> : vector<8x160xf32>
    %153 = tpu.matmul %151, %152, %cst_84 {dimension_numbers = #tpu.dot_dimension_numbers<[1], [0], [0], [1], [0, 0, 1, 1], [], []>} : vector<8x32xf32>, vector<32x160xf32>, vector<8x160xf32> -> vector<8x160xf32>
    %c0_85 = arith.constant 0 : index
    %c0_86 = arith.constant 0 : index
    %154 = vector.load %arg24[%c0_85, %c0_86] : memref<32x160xf32, #tpu.memory_space<vmem>>, vector<32x160xf32>
    %cst_87 = arith.constant dense<0.000000e+00> : vector<8x160xf32>
    %155 = tpu.matmul %141, %154, %cst_87 {dimension_numbers = #tpu.dot_dimension_numbers<[1], [0], [0], [1], [0, 0, 1, 1], [], []>} : vector<8x32xf32>, vector<32x160xf32>, vector<8x160xf32> -> vector<8x160xf32>
    %156 = arith.addf %153, %155 : vector<8x160xf32>
    %c2 = arith.constant 2 : index
    %c0_88 = arith.constant 0 : index
    %c0_89 = arith.constant 0 : index
    %157 = vector.load %arg5[%c2, %c0_88, %c0_89] : memref<3x8x32xf32, #tpu.memory_space<vmem>>, vector<1x8x32xf32>
    %158 = vector.shape_cast %157 : vector<1x8x32xf32> to vector<8x32xf32>
    %c0_90 = arith.constant 0 : index
    %c0_91 = arith.constant 0 : index
    %159 = vector.load %arg26[%c0_90, %c0_91] : memref<32x160xf32, #tpu.memory_space<vmem>>, vector<32x160xf32>
    %cst_92 = arith.constant dense<0.000000e+00> : vector<8x160xf32>
    %160 = tpu.matmul %158, %159, %cst_92 {dimension_numbers = #tpu.dot_dimension_numbers<[1], [0], [0], [1], [0, 0, 1, 1], [], []>} : vector<8x32xf32>, vector<32x160xf32>, vector<8x160xf32> -> vector<8x160xf32>
    %161 = arith.addf %156, %160 : vector<8x160xf32>
    %c0_93 = arith.constant 0 : index
    %c0_94 = arith.constant 0 : index
    %162 = vector.load %arg25[%c0_93, %c0_94] : memref<1x160xf32, #tpu.memory_space<vmem>>, vector<1x160xf32>
    %163 = vector.broadcast %162 : vector<1x160xf32> to vector<8x160xf32>
    %164 = arith.addf %161, %163 : vector<8x160xf32>
    %c2_95 = arith.constant 2 : index
    %c0_96 = arith.constant 0 : index
    %c0_97 = arith.constant 0 : index
    %165 = vector.load %arg6[%c2_95, %c0_96, %c0_97] : memref<3x8x32xf32, #tpu.memory_space<vmem>>, vector<1x8x32xf32>
    %166 = vector.shape_cast %165 : vector<1x8x32xf32> to vector<8x32xf32>
    %167 = vector.extract_strided_slice %164 {offsets = [0, 0], sizes = [8, 96], strides = [1, 1]} : vector<8x160xf32> to vector<8x96xf32>
    %168 = arith.negf %167 : vector<8x96xf32>
    %169 = math.exp %168 : vector<8x96xf32>
    %cst_98 = arith.constant 1.000000e+00 : f32
    %170 = vector.broadcast %cst_98 : f32 to vector<8x96xf32>
    %171 = arith.addf %170, %169 : vector<8x96xf32>
    %172 = arith.divf %170, %171 : vector<8x96xf32>
    %173 = vector.extract_strided_slice %172 {offsets = [0, 0], sizes = [8, 32], strides = [1, 1]} : vector<8x96xf32> to vector<8x32xf32>
    %174 = vector.extract_strided_slice %172 {offsets = [0, 32], sizes = [8, 32], strides = [1, 1]} : vector<8x96xf32> to vector<8x32xf32>
    %175 = vector.extract_strided_slice %172 {offsets = [0, 64], sizes = [8, 32], strides = [1, 1]} : vector<8x96xf32> to vector<8x32xf32>
    %176 = vector.extract_strided_slice %164 {offsets = [0, 96], sizes = [8, 32], strides = [1, 1]} : vector<8x160xf32> to vector<8x32xf32>
    %177 = vector.extract_strided_slice %164 {offsets = [0, 128], sizes = [8, 32], strides = [1, 1]} : vector<8x160xf32> to vector<8x32xf32>
    %178 = arith.maximumf %176, %177 : vector<8x32xf32>
    %179 = arith.mulf %174, %166 : vector<8x32xf32>
    %180 = arith.mulf %173, %178 : vector<8x32xf32>
    %181 = arith.addf %179, %180 : vector<8x32xf32>
    %182 = math.tanh %181 : vector<8x32xf32>
    %183 = arith.mulf %175, %182 : vector<8x32xf32>
    %c2_99 = arith.constant 2 : index
    %c0_100 = arith.constant 0 : index
    %c0_101 = arith.constant 0 : index
    %184 = vector.load %arg30[%c2_99, %c0_100, %c0_101] : memref<3x8x32xf32, #tpu.memory_space<vmem>>, vector<1x8x32xf32>
    %185 = vector.shape_cast %184 : vector<1x8x32xf32> to vector<8x32xf32>
    %186 = vector.shape_cast %183 : vector<8x32xf32> to vector<1x8x32xf32>
    tpu.vector_store %arg30[%c2_99, %c0_100, %c0_101], %186 {strides = array<i32>} : memref<3x8x32xf32, #tpu.memory_space<vmem>>, vector<1x8x32xf32>,
    %c2_102 = arith.constant 2 : index
    %c0_103 = arith.constant 0 : index
    %c0_104 = arith.constant 0 : index
    %187 = vector.load %arg31[%c2_102, %c0_103, %c0_104] : memref<3x8x32xf32, #tpu.memory_space<vmem>>, vector<1x8x32xf32>
    %188 = vector.shape_cast %187 : vector<1x8x32xf32> to vector<8x32xf32>
    %189 = vector.shape_cast %181 : vector<8x32xf32> to vector<1x8x32xf32>
    tpu.vector_store %arg31[%c2_102, %c0_103, %c0_104], %189 {strides = array<i32>} : memref<3x8x32xf32, #tpu.memory_space<vmem>>, vector<1x8x32xf32>,
    %190 = arith.addf %46, %145 : vector<8x32xf32>
    %c0_105 = arith.constant 0 : index
    %c0_106 = arith.constant 0 : index
    %191 = vector.load %arg27[%c0_105, %c0_106] : memref<32x32xf32, #tpu.memory_space<vmem>>, vector<32x32xf32>
    %cst_107 = arith.constant dense<0.000000e+00> : vector<8x32xf32>
    %192 = tpu.matmul %183, %191, %cst_107 {dimension_numbers = #tpu.dot_dimension_numbers<[1], [0], [0], [1], [0, 0, 1, 1], [], []>} : vector<8x32xf32>, vector<32x32xf32>, vector<8x32xf32> -> vector<8x32xf32>
    %193 = arith.addf %190, %192 : vector<8x32xf32>
    %c0_108 = arith.constant 0 : index
    %c0_109 = arith.constant 0 : index
    %194 = vector.load %arg28[%c0_108, %c0_109] : memref<1x32xf32, #tpu.memory_space<vmem>>, vector<1x32xf32>
    %195 = vector.broadcast %194 : vector<1x32xf32> to vector<8x32xf32>
    %196 = arith.addf %193, %195 : vector<8x32xf32>
    %cst_110 = arith.constant 0.000000e+00 : f32
    %197 = vector.broadcast %cst_110 : f32 to vector<8x32xf32>
    %198 = arith.maximumf %196, %197 : vector<8x32xf32>
    %c0_111 = arith.constant 0 : index
    %c0_112 = arith.constant 0 : index
    %199 = vector.load %arg29[%c0_111, %c0_112] : memref<8x32xf32, #tpu.memory_space<vmem>>, vector<8x32xf32>
    tpu.vector_store %arg29[%c0_111, %c0_112], %198 {strides = array<i32>} : memref<8x32xf32, #tpu.memory_space<vmem>>, vector<8x32xf32>,
    return
  }
  func.func @transform_0(%arg0: i32) -> (i32, i32) {
    %c0_i32 = arith.constant 0 : i32
    %c0_i32_0 = arith.constant 0 : i32
    return %arg0, %c0_i32 : i32, i32
  }
  func.func @transform_1(%arg0: i32) -> (i32, i32) {
    %c0_i32 = arith.constant 0 : i32
    %c0_i32_0 = arith.constant 0 : i32
    return %arg0, %c0_i32 : i32, i32
  }
  func.func @transform_2(%arg0: i32) -> (i32, i32, i32) {
    %c0_i32 = arith.constant 0 : i32
    %c0_i32_0 = arith.constant 0 : i32
    %c0_i32_1 = arith.constant 0 : i32
    return %arg0, %c0_i32, %c0_i32_0 : i32, i32, i32
  }
  func.func @transform_3(%arg0: i32) -> (i32, i32, i32) {
    %c0_i32 = arith.constant 0 : i32
    %c0_i32_0 = arith.constant 0 : i32
    %c0_i32_1 = arith.constant 0 : i32
    return %arg0, %c0_i32, %c0_i32_0 : i32, i32, i32
  }
  func.func @transform_4(%arg0: i32) -> (i32, i32, i32) {
    %c0_i32 = arith.constant 0 : i32
    %c0_i32_0 = arith.constant 0 : i32
    %c0_i32_1 = arith.constant 0 : i32
    return %c0_i32, %arg0, %c0_i32_0 : i32, i32, i32
  }
  func.func @transform_5(%arg0: i32) -> (i32, i32, i32) {
    %c0_i32 = arith.constant 0 : i32
    %c0_i32_0 = arith.constant 0 : i32
    %c0_i32_1 = arith.constant 0 : i32
    return %c0_i32, %arg0, %c0_i32_0 : i32, i32, i32
  }
  func.func @transform_6(%arg0: i32) -> (i32, i32) {
    %c0_i32 = arith.constant 0 : i32
    %c0_i32_0 = arith.constant 0 : i32
    %c0_i32_1 = arith.constant 0 : i32
    return %c0_i32, %c0_i32_0 : i32, i32
  }
  func.func @transform_7(%arg0: i32) -> (i32, i32) {
    %c0_i32 = arith.constant 0 : i32
    %c0_i32_0 = arith.constant 0 : i32
    %c0_i32_1 = arith.constant 0 : i32
    return %c0_i32, %c0_i32_0 : i32, i32
  }
  func.func @transform_8(%arg0: i32) -> (i32, i32) {
    %c0_i32 = arith.constant 0 : i32
    %c0_i32_0 = arith.constant 0 : i32
    %c0_i32_1 = arith.constant 0 : i32
    return %c0_i32, %c0_i32_0 : i32, i32
  }
  func.func @transform_9(%arg0: i32) -> (i32, i32) {
    %c0_i32 = arith.constant 0 : i32
    %c0_i32_0 = arith.constant 0 : i32
    %c0_i32_1 = arith.constant 0 : i32
    return %c0_i32, %c0_i32_0 : i32, i32
  }
  func.func @transform_10(%arg0: i32) -> (i32, i32) {
    %c0_i32 = arith.constant 0 : i32
    %c0_i32_0 = arith.constant 0 : i32
    %c0_i32_1 = arith.constant 0 : i32
    return %c0_i32, %c0_i32_0 : i32, i32
  }
  func.func @transform_11(%arg0: i32) -> (i32, i32) {
    %c0_i32 = arith.constant 0 : i32
    %c0_i32_0 = arith.constant 0 : i32
    %c0_i32_1 = arith.constant 0 : i32
    return %c0_i32, %c0_i32_0 : i32, i32
  }
  func.func @transform_12(%arg0: i32) -> (i32, i32) {
    %c0_i32 = arith.constant 0 : i32
    %c0_i32_0 = arith.constant 0 : i32
    %c0_i32_1 = arith.constant 0 : i32
    return %c0_i32, %c0_i32_0 : i32, i32
  }
  func.func @transform_13(%arg0: i32) -> (i32, i32) {
    %c0_i32 = arith.constant 0 : i32
    %c0_i32_0 = arith.constant 0 : i32
    %c0_i32_1 = arith.constant 0 : i32
    return %c0_i32, %c0_i32_0 : i32, i32
  }
  func.func @transform_14(%arg0: i32) -> (i32, i32) {
    %c0_i32 = arith.constant 0 : i32
    %c0_i32_0 = arith.constant 0 : i32
    %c0_i32_1 = arith.constant 0 : i32
    return %c0_i32, %c0_i32_0 : i32, i32
  }
  func.func @transform_15(%arg0: i32) -> (i32, i32) {
    %c0_i32 = arith.constant 0 : i32
    %c0_i32_0 = arith.constant 0 : i32
    %c0_i32_1 = arith.constant 0 : i32
    return %c0_i32, %c0_i32_0 : i32, i32
  }
  func.func @transform_16(%arg0: i32) -> (i32, i32) {
    %c0_i32 = arith.constant 0 : i32
    %c0_i32_0 = arith.constant 0 : i32
    %c0_i32_1 = arith.constant 0 : i32
    return %c0_i32, %c0_i32_0 : i32, i32
  }
  func.func @transform_17(%arg0: i32) -> (i32, i32) {
    %c0_i32 = arith.constant 0 : i32
    %c0_i32_0 = arith.constant 0 : i32
    %c0_i32_1 = arith.constant 0 : i32
    return %c0_i32, %c0_i32_0 : i32, i32
  }
  func.func @transform_18(%arg0: i32) -> (i32, i32) {
    %c0_i32 = arith.constant 0 : i32
    %c0_i32_0 = arith.constant 0 : i32
    %c0_i32_1 = arith.constant 0 : i32
    return %c0_i32, %c0_i32_0 : i32, i32
  }
  func.func @transform_19(%arg0: i32) -> (i32, i32) {
    %c0_i32 = arith.constant 0 : i32
    %c0_i32_0 = arith.constant 0 : i32
    %c0_i32_1 = arith.constant 0 : i32
    return %c0_i32, %c0_i32_0 : i32, i32
  }
  func.func @transform_20(%arg0: i32) -> (i32, i32) {
    %c0_i32 = arith.constant 0 : i32
    %c0_i32_0 = arith.constant 0 : i32
    %c0_i32_1 = arith.constant 0 : i32
    return %c0_i32, %c0_i32_0 : i32, i32
  }
  func.func @transform_21(%arg0: i32) -> (i32, i32) {
    %c0_i32 = arith.constant 0 : i32
    %c0_i32_0 = arith.constant 0 : i32
    %c0_i32_1 = arith.constant 0 : i32
    return %c0_i32, %c0_i32_0 : i32, i32
  }
  func.func @transform_22(%arg0: i32) -> (i32, i32) {
    %c0_i32 = arith.constant 0 : i32
    %c0_i32_0 = arith.constant 0 : i32
    %c0_i32_1 = arith.constant 0 : i32
    return %c0_i32, %c0_i32_0 : i32, i32
  }
  func.func @transform_23(%arg0: i32) -> (i32, i32) {
    %c0_i32 = arith.constant 0 : i32
    %c0_i32_0 = arith.constant 0 : i32
    %c0_i32_1 = arith.constant 0 : i32
    return %c0_i32, %c0_i32_0 : i32, i32
  }
  func.func @transform_24(%arg0: i32) -> (i32, i32) {
    %c0_i32 = arith.constant 0 : i32
    %c0_i32_0 = arith.constant 0 : i32
    %c0_i32_1 = arith.constant 0 : i32
    return %c0_i32, %c0_i32_0 : i32, i32
  }
  func.func @transform_25(%arg0: i32) -> (i32, i32) {
    %c0_i32 = arith.constant 0 : i32
    %c0_i32_0 = arith.constant 0 : i32
    %c0_i32_1 = arith.constant 0 : i32
    return %c0_i32, %c0_i32_0 : i32, i32
  }
  func.func @transform_26(%arg0: i32) -> (i32, i32) {
    %c0_i32 = arith.constant 0 : i32
    %c0_i32_0 = arith.constant 0 : i32
    %c0_i32_1 = arith.constant 0 : i32
    return %c0_i32, %c0_i32_0 : i32, i32
  }
  func.func @transform_27(%arg0: i32) -> (i32, i32) {
    %c0_i32 = arith.constant 0 : i32
    %c0_i32_0 = arith.constant 0 : i32
    %c0_i32_1 = arith.constant 0 : i32
    return %c0_i32, %c0_i32_0 : i32, i32
  }
  func.func @transform_28(%arg0: i32) -> (i32, i32) {
    %c0_i32 = arith.constant 0 : i32
    %c0_i32_0 = arith.constant 0 : i32
    return %arg0, %c0_i32 : i32, i32
  }
  func.func @transform_29(%arg0: i32) -> (i32, i32, i32) {
    %c0_i32 = arith.constant 0 : i32
    %c0_i32_0 = arith.constant 0 : i32
    %c0_i32_1 = arith.constant 0 : i32
    return %c0_i32, %arg0, %c0_i32_0 : i32, i32, i32
  }
  func.func @transform_30(%arg0: i32) -> (i32, i32, i32) {
    %c0_i32 = arith.constant 0 : i32
    %c0_i32_0 = arith.constant 0 : i32
    %c0_i32_1 = arith.constant 0 : i32
    return %c0_i32, %arg0, %c0_i32_0 : i32, i32, i32
  }
}

</mosaic_0001>

<llo_original>
// kernel: dense_att_core_forward.1
$region0: #{dense_att_core_forward.1}
  #allocation0 [shape = 'u32[]', space=smem, size = 0x4, offset = 0x4, fixed_abs, tag = 'smem constant byte address 0x4 - core index']
  #allocation1 [shape = 'u32[72,128]{1,0:T(1,128)}', space=vmem, size = 0x9000, scoped, tag = 'internal scratch']
  %s0 = inlined_call_operand.smem [shape: u32[31], index: -1, kind: input, shape index: {}]
  %s1 = sld [smem:[%s0]]
  %s2 = scalar_lea.smem %s0, 1
  %s3 = sld [smem:[%s2]]
  %s4 = scalar_lea.smem %s0, 2
  %s5 = sld [smem:[%s4]]
  %s6 = scalar_lea.smem %s0, 3
  %s7 = sld [smem:[%s6]]
  %s8 = scalar_lea.smem %s0, 4
  %s9 = sld [smem:[%s8]]
  %s10 = scalar_lea.smem %s0, 5
  %s11 = sld [smem:[%s10]]
  %s12 = scalar_lea.smem %s0, 6
  %s13 = sld [smem:[%s12]]
  %s14 = scalar_lea.smem %s0, 7
  %s15 = sld [smem:[%s14]]
  %s16 = scalar_lea.smem %s0, 8
  %s17 = sld [smem:[%s16]]
  %s18 = scalar_lea.smem %s0, 9
  %s19 = sld [smem:[%s18]]
  %s20 = scalar_lea.smem %s0, 10
  %s21 = sld [smem:[%s20]]
  %s22 = scalar_lea.smem %s0, 11
  %s23 = sld [smem:[%s22]]
  %s24 = scalar_lea.smem %s0, 12
  %s25 = sld [smem:[%s24]]
  %s26 = scalar_lea.smem %s0, 13
  %s27 = sld [smem:[%s26]]
  %s28 = scalar_lea.smem %s0, 14
  %s29 = sld [smem:[%s28]]
  %s30 = scalar_lea.smem %s0, 15
  %s31 = sld [smem:[%s30]]
  %s32 = scalar_lea.smem %s0, 16
  %s33 = sld [smem:[%s32]]
  %s34 = scalar_lea.smem %s0, 17
  %s35 = sld [smem:[%s34]]
  %s36 = scalar_lea.smem %s0, 18
  %s37 = sld [smem:[%s36]]
  %s38 = scalar_lea.smem %s0, 19
  %s39 = sld [smem:[%s38]]
  %s40 = scalar_lea.smem %s0, 20
  %s41 = sld [smem:[%s40]]
  %s42 = scalar_lea.smem %s0, 21
  %s43 = sld [smem:[%s42]]
  %s44 = scalar_lea.smem %s0, 22
  %s45 = sld [smem:[%s44]]
  %s46 = scalar_lea.smem %s0, 23
  %s47 = sld [smem:[%s46]]
  %s48 = scalar_lea.smem %s0, 24
  %s49 = sld [smem:[%s48]]
  %s50 = scalar_lea.smem %s0, 25
  %s51 = sld [smem:[%s50]]
  %s52 = scalar_lea.smem %s0, 26
  %s53 = sld [smem:[%s52]]
  %s54 = scalar_lea.smem %s0, 27
  %s55 = sld [smem:[%s54]]
  %s56 = scalar_lea.smem %s0, 28
  %s57 = sld [smem:[%s56]]
  %s58 = scalar_lea.smem %s0, 29
  %s59 = sld [smem:[%s58]]
  %s60 = scalar_lea.smem %s0, 30
  %s61 = sld [smem:[%s60]]
  %62 = xla_tuple %s57, %s59, %s61
  %s63 = sld [smem:[#allocation0]]
  $region174: #{dense_att_core_forward.1} parent=0
    _
  %s65 = ssub.s32 1, %s63
  %s66 = scalar_select 0, %s65, %s63
  $region1: #{dense_att_core_forward.1} parent=0
    #allocation2 [shape = 'u8[32768]{0}', space=vmem, size = 0x8000, scoped, tag = 'input window, operand 10, single buffered']
    #allocation3 [shape = 's32[1]{0}', space=sflag, size = 0x4, scoped, tag = 'scoped memory for dense_att_core_forward.1']
    #allocation4 [shape = 'u8[32768]{0}', space=vmem, size = 0x8000, scoped, tag = 'input window, operand 13, single buffered']
    #allocation5 [shape = 's32[1]{0}', space=sflag, size = 0x4, scoped, tag = 'scoped memory for dense_att_core_forward.1']
    #allocation6 [shape = 'u8[32768]{0}', space=vmem, size = 0x8000, scoped, tag = 'input window, operand 15, single buffered']
    #allocation7 [shape = 'u8[16384]{0}', space=vmem, size = 0x4000, scoped, tag = 'input window, operand 17, single buffered']
    #allocation8 [shape = 's32[1]{0}', space=sflag, size = 0x4, scoped, tag = 'scoped memory for dense_att_core_forward.1']
    #allocation9 [shape = 'u8[16384]{0}', space=vmem, size = 0x4000, scoped, tag = 'input window, operand 20, single buffered']
    #allocation10 [shape = 'u8[32768]{0}', space=vmem, size = 0x8000, scoped, tag = 'input window, operand 22, single buffered']
    #allocation11 [shape = 's32[1]{0}', space=sflag, size = 0x4, scoped, tag = 'scoped memory for dense_att_core_forward.1']
    #allocation12 [shape = 'u8[32768]{0}', space=vmem, size = 0x8000, scoped, tag = 'input window, operand 23, single buffered']
    #allocation13 [shape = 'u8[32768]{0}', space=vmem, size = 0x8000, scoped, tag = 'input window, operand 25, single buffered']
    #allocation14 [shape = 's32[1]{0}', space=sflag, size = 0x4, scoped, tag = 'scoped memory for dense_att_core_forward.1']
    #allocation15 [shape = 'u8[16384]{0}', space=vmem, size = 0x4000, scoped, tag = 'input window, operand 26, single buffered']
    %67 = vsyncpa [#allocation3], 0
    %68 = vsyncpa [#allocation5], 0
    %69 = vsyncpa [#allocation8], 0
    %70 = vsyncpa [#allocation11], 0
    %71 = vsyncpa [#allocation14], 0
    // Predicated region
    $region2: #{dense_att_core_forward.1} parent=1 // pred_check
      _
    $region3: #{dense_att_core_forward.1} parent=1 // pred_check_branch
      %73 = sbr.rel (0) target = $region5
    $region4: #{dense_att_core_forward.1} parent=1 // pred_region
      _
    $region5: #{dense_att_core_forward.1} parent=1 // pred_fallthru
      _
    // Predicated region
    $region6: #{dense_att_core_forward.1} parent=1 // pred_check
      _
    $region7: #{dense_att_core_forward.1} parent=1 // pred_check_branch
      %75 = sbr.rel (0) target = $region9
    $region8: #{dense_att_core_forward.1} parent=1 // pred_region
      _
    $region9: #{dense_att_core_forward.1} parent=1 // pred_fallthru
      _
    // Predicated region
    $region10: #{dense_att_core_forward.1} parent=1 // pred_check
      _
    $region11: #{dense_att_core_forward.1} parent=1 // pred_check_branch
      %77 = sbr.rel (0) target = $region13
    $region12: #{dense_att_core_forward.1} parent=1 // pred_region
      _
    $region13: #{dense_att_core_forward.1} parent=1 // pred_fallthru
      _
    // Predicated region
    $region14: #{dense_att_core_forward.1} parent=1 // pred_check
      _
    $region15: #{dense_att_core_forward.1} parent=1 // pred_check_branch
      %79 = sbr.rel (0) target = $region17
    $region16: #{dense_att_core_forward.1} parent=1 // pred_region
      _
    $region17: #{dense_att_core_forward.1} parent=1 // pred_fallthru
      _
    // Predicated region
    $region18: #{dense_att_core_forward.1} parent=1 // pred_check
      _
    $region19: #{dense_att_core_forward.1} parent=1 // pred_check_branch
      %81 = sbr.rel (0) target = $region21
    $region20: #{dense_att_core_forward.1} parent=1 // pred_region
      _
    $region21: #{dense_att_core_forward.1} parent=1 // pred_fallthru
      _
    // Predicated region
    $region22: #{dense_att_core_forward.1} parent=1 // pred_check
      _
    $region23: #{dense_att_core_forward.1} parent=1 // pred_check_branch
      %83 = sbr.rel (0) target = $region25
    $region24: #{dense_att_core_forward.1} parent=1 // pred_region
      _
    $region25: #{dense_att_core_forward.1} parent=1 // pred_fallthru
      _
    // Predicated region
    $region26: #{dense_att_core_forward.1} parent=1 // pred_check
      _
    $region27: #{dense_att_core_forward.1} parent=1 // pred_check_branch
      %85 = sbr.rel (0) target = $region29
    $region28: #{dense_att_core_forward.1} parent=1 // pred_region
      _
    $region29: #{dense_att_core_forward.1} parent=1 // pred_fallthru
      _
    // Predicated region
    $region30: #{dense_att_core_forward.1} parent=1 // pred_check
      _
    $region31: #{dense_att_core_forward.1} parent=1 // pred_check_branch
      %87 = sbr.rel (0) target = $region33
    $region32: #{dense_att_core_forward.1} parent=1 // pred_region
      _
    $region33: #{dense_att_core_forward.1} parent=1 // pred_fallthru
      _
    // Predicated region
    $region34: #{dense_att_core_forward.1} parent=1 // pred_check
      _
    $region35: #{dense_att_core_forward.1} parent=1 // pred_check_branch
      %89 = sbr.rel (0) target = $region37
    $region36: #{dense_att_core_forward.1} parent=1 // pred_region
      _
    $region37: #{dense_att_core_forward.1} parent=1 // pred_fallthru
      _
    // Predicated region
    $region38: #{dense_att_core_forward.1} parent=1 // pred_check
      _
    $region39: #{dense_att_core_forward.1} parent=1 // pred_check_branch
      %91 = sbr.rel (0) target = $region41
    $region40: #{dense_att_core_forward.1} parent=1 // pred_region
      _
    $region41: #{dense_att_core_forward.1} parent=1 // pred_fallthru
      _
    // Predicated region
    $region42: #{dense_att_core_forward.1} parent=1 // pred_check
      _
    $region43: #{dense_att_core_forward.1} parent=1 // pred_check_branch
      %93 = sbr.rel (0) target = $region45
    $region44: #{dense_att_core_forward.1} parent=1 // pred_region
      %95 = vsyncadd [#allocation3], 0
      %s96 = sshll.u32 %s21, 4
      %s97 = int_to_ptr.hbm [resolvable:$true] %s96
      %s98 = sshll.u32 [#allocation2], 4
      %s99 = int_to_ptr.vmem [resolvable:$true] %s98
      %104 = dma.hbm_to_vmem [thread:$0]  %s97, 1024, %s99, [#allocation3], 256, 256, 16
    $region45: #{dense_att_core_forward.1} parent=1 // pred_fallthru
      _
    // Predicated region
    $region46: #{dense_att_core_forward.1} parent=1 // pred_check
      _
    $region47: #{dense_att_core_forward.1} parent=1 // pred_check_branch
      %106 = sbr.rel (0) target = $region49
    $region48: #{dense_att_core_forward.1} parent=1 // pred_region
      _
    $region49: #{dense_att_core_forward.1} parent=1 // pred_fallthru
      _
    // Predicated region
    $region50: #{dense_att_core_forward.1} parent=1 // pred_check
      _
    $region51: #{dense_att_core_forward.1} parent=1 // pred_check_branch
      %108 = sbr.rel (0) target = $region53
    $region52: #{dense_att_core_forward.1} parent=1 // pred_region
      _
    $region53: #{dense_att_core_forward.1} parent=1 // pred_fallthru
      _
    // Predicated region
    $region54: #{dense_att_core_forward.1} parent=1 // pred_check
      _
    $region55: #{dense_att_core_forward.1} parent=1 // pred_check_branch
      %110 = sbr.rel (0) target = $region57
    $region56: #{dense_att_core_forward.1} parent=1 // pred_region
      %112 = vsyncadd [#allocation5], 0
      %s113 = sshll.u32 %s27, 4
      %s114 = int_to_ptr.hbm [resolvable:$true] %s113
      %s115 = sshll.u32 [#allocation4], 4
      %s116 = int_to_ptr.vmem [resolvable:$true] %s115
      %121 = dma.hbm_to_vmem [thread:$0]  %s114, 1024, %s116, [#allocation5], 256, 256, 16
    $region57: #{dense_att_core_forward.1} parent=1 // pred_fallthru
      _
    // Predicated region
    $region58: #{dense_att_core_forward.1} parent=1 // pred_check
      _
    $region59: #{dense_att_core_forward.1} parent=1 // pred_check_branch
      %123 = sbr.rel (0) target = $region61
    $region60: #{dense_att_core_forward.1} parent=1 // pred_region
      _
    $region61: #{dense_att_core_forward.1} parent=1 // pred_fallthru
      _
    // Predicated region
    $region62: #{dense_att_core_forward.1} parent=1 // pred_check
      _
    $region63: #{dense_att_core_forward.1} parent=1 // pred_check_branch
      %125 = sbr.rel (0) target = $region65
    $region64: #{dense_att_core_forward.1} parent=1 // pred_region
      %127 = vsyncadd [#allocation5], 0
      %s128 = sshll.u32 %s31, 4
      %s129 = int_to_ptr.hbm [resolvable:$true] %s128
      %s130 = sshll.u32 [#allocation6], 4
      %s131 = int_to_ptr.vmem [resolvable:$true] %s130
      %136 = dma.hbm_to_vmem [thread:$0]  %s129, 1024, %s131, [#allocation5], 256, 256, 16
    $region65: #{dense_att_core_forward.1} parent=1 // pred_fallthru
      _
    // Predicated region
    $region66: #{dense_att_core_forward.1} parent=1 // pred_check
      _
    $region67: #{dense_att_core_forward.1} parent=1 // pred_check_branch
      %138 = sbr.rel (0) target = $region69
    $region68: #{dense_att_core_forward.1} parent=1 // pred_region
      _
    $region69: #{dense_att_core_forward.1} parent=1 // pred_fallthru
      _
    // Predicated region
    $region70: #{dense_att_core_forward.1} parent=1 // pred_check
      _
    $region71: #{dense_att_core_forward.1} parent=1 // pred_check_branch
      %140 = sbr.rel (0) target = $region73
    $region72: #{dense_att_core_forward.1} parent=1 // pred_region
      %142 = vsyncadd [#allocation8], 0
      %s143 = sshll.u32 %s35, 4
      %s144 = int_to_ptr.hbm [resolvable:$true] %s143
      %s145 = sshll.u32 [#allocation7], 4
      %s146 = int_to_ptr.vmem [resolvable:$true] %s145
      %151 = dma.hbm_to_vmem [thread:$0]  %s144, 512, %s146, [#allocation8], 128, 128, 8
    $region73: #{dense_att_core_forward.1} parent=1 // pred_fallthru
      _
    // Predicated region
    $region74: #{dense_att_core_forward.1} parent=1 // pred_check
      _
    $region75: #{dense_att_core_forward.1} parent=1 // pred_check_branch
      %153 = sbr.rel (0) target = $region77
    $region76: #{dense_att_core_forward.1} parent=1 // pred_region
      _
    $region77: #{dense_att_core_forward.1} parent=1 // pred_fallthru
      _
    // Predicated region
    $region78: #{dense_att_core_forward.1} parent=1 // pred_check
      _
    $region79: #{dense_att_core_forward.1} parent=1 // pred_check_branch
      %155 = sbr.rel (0) target = $region81
    $region80: #{dense_att_core_forward.1} parent=1 // pred_region
      _
    $region81: #{dense_att_core_forward.1} parent=1 // pred_fallthru
      _
    // Predicated region
    $region82: #{dense_att_core_forward.1} parent=1 // pred_check
      _
    $region83: #{dense_att_core_forward.1} parent=1 // pred_check_branch
      %157 = sbr.rel (0) target = $region85
    $region84: #{dense_att_core_forward.1} parent=1 // pred_region
      %159 = vsyncadd [#allocation8], 0
      %s160 = sshll.u32 %s41, 4
      %s161 = int_to_ptr.hbm [resolvable:$true] %s160
      %s162 = sshll.u32 [#allocation9], 4
      %s163 = int_to_ptr.vmem [resolvable:$true] %s162
      %168 = dma.hbm_to_vmem [thread:$0]  %s161, 512, %s163, [#allocation8], 128, 128, 8
    $region85: #{dense_att_core_forward.1} parent=1 // pred_fallthru
      _
    // Predicated region
    $region86: #{dense_att_core_forward.1} parent=1 // pred_check
      _
    $region87: #{dense_att_core_forward.1} parent=1 // pred_check_branch
      %170 = sbr.rel (0) target = $region89
    $region88: #{dense_att_core_forward.1} parent=1 // pred_region
      _
    $region89: #{dense_att_core_forward.1} parent=1 // pred_fallthru
      _
    // Predicated region
    $region90: #{dense_att_core_forward.1} parent=1 // pred_check
      _
    $region91: #{dense_att_core_forward.1} parent=1 // pred_check_branch
      %172 = sbr.rel (0) target = $region93
    $region92: #{dense_att_core_forward.1} parent=1 // pred_region
      %174 = vsyncadd [#allocation11], 0
      %s175 = sshll.u32 %s45, 4
      %s176 = int_to_ptr.hbm [resolvable:$true] %s175
      %s177 = sshll.u32 [#allocation10], 4
      %s178 = int_to_ptr.vmem [resolvable:$true] %s177
      %183 = dma.hbm_to_vmem [thread:$0]  %s176, 1024, %s178, [#allocation11], 256, 256, 16
    $region93: #{dense_att_core_forward.1} parent=1 // pred_fallthru
      _
    // Predicated region
    $region94: #{dense_att_core_forward.1} parent=1 // pred_check
      _
    $region95: #{dense_att_core_forward.1} parent=1 // pred_check_branch
      %185 = sbr.rel (0) target = $region97
    $region96: #{dense_att_core_forward.1} parent=1 // pred_region
      %187 = vsyncadd [#allocation11], 0
      %s188 = sshll.u32 %s47, 4
      %s189 = int_to_ptr.hbm [resolvable:$true] %s188
      %s190 = sshll.u32 [#allocation12], 4
      %s191 = int_to_ptr.vmem [resolvable:$true] %s190
      %196 = dma.hbm_to_vmem [thread:$0]  %s189, 1024, %s191, [#allocation11], 256, 256, 16
    $region97: #{dense_att_core_forward.1} parent=1 // pred_fallthru
      _
    // Predicated region
    $region98: #{dense_att_core_forward.1} parent=1 // pred_check
      _
    $region99: #{dense_att_core_forward.1} parent=1 // pred_check_branch
      %198 = sbr.rel (0) target = $region101
    $region100: #{dense_att_core_forward.1} parent=1 // pred_region
      _
    $region101: #{dense_att_core_forward.1} parent=1 // pred_fallthru
      _
    // Predicated region
    $region102: #{dense_att_core_forward.1} parent=1 // pred_check
      _
    $region103: #{dense_att_core_forward.1} parent=1 // pred_check_branch
      %200 = sbr.rel (0) target = $region105
    $region104: #{dense_att_core_forward.1} parent=1 // pred_region
      %202 = vsyncadd [#allocation14], 0
      %s203 = sshll.u32 %s51, 4
      %s204 = int_to_ptr.hbm [resolvable:$true] %s203
      %s205 = sshll.u32 [#allocation13], 4
      %s206 = int_to_ptr.vmem [resolvable:$true] %s205
      %211 = dma.hbm_to_vmem [thread:$0]  %s204, 1024, %s206, [#allocation14], 256, 256, 16
    $region105: #{dense_att_core_forward.1} parent=1 // pred_fallthru
      _
    // Predicated region
    $region106: #{dense_att_core_forward.1} parent=1 // pred_check
      _
    $region107: #{dense_att_core_forward.1} parent=1 // pred_check_branch
      %213 = sbr.rel (0) target = $region109
    $region108: #{dense_att_core_forward.1} parent=1 // pred_region
      %215 = vsyncadd [#allocation14], 0
      %s216 = sshll.u32 %s53, 4
      %s217 = int_to_ptr.hbm [resolvable:$true] %s216
      %s218 = sshll.u32 [#allocation15], 4
      %s219 = int_to_ptr.vmem [resolvable:$true] %s218
      %224 = dma.hbm_to_vmem [thread:$0]  %s217, 512, %s219, [#allocation14], 128, 128, 8
    $region109: #{dense_att_core_forward.1} parent=1 // pred_fallthru
      _
    // Predicated region
    $region110: #{dense_att_core_forward.1} parent=1 // pred_check
      _
    $region111: #{dense_att_core_forward.1} parent=1 // pred_check_branch
      %226 = sbr.rel (0) target = $region113
    $region112: #{dense_att_core_forward.1} parent=1 // pred_region
      _
    $region113: #{dense_att_core_forward.1} parent=1 // pred_fallthru
      _
    // Predicated region
    $region114: #{dense_att_core_forward.1} parent=1 // pred_check
      _
    $region115: #{dense_att_core_forward.1} parent=1 // pred_check_branch
      %228 = sbr.rel (0) target = $region117
    $region116: #{dense_att_core_forward.1} parent=1 // pred_region
      %230 = dma.done [#allocation3], 1024
    $region117: #{dense_att_core_forward.1} parent=1 // pred_fallthru
      _
    // Predicated region
    $region118: #{dense_att_core_forward.1} parent=1 // pred_check
      _
    $region119: #{dense_att_core_forward.1} parent=1 // pred_check_branch
      %232 = sbr.rel (0) target = $region121
    $region120: #{dense_att_core_forward.1} parent=1 // pred_region
      %234 = dma.done [#allocation5], 1024
    $region121: #{dense_att_core_forward.1} parent=1 // pred_fallthru
      _
    // Predicated region
    $region122: #{dense_att_core_forward.1} parent=1 // pred_check
      _
    $region123: #{dense_att_core_forward.1} parent=1 // pred_check_branch
      %236 = sbr.rel (0) target = $region125
    $region124: #{dense_att_core_forward.1} parent=1 // pred_region
      %238 = dma.done [#allocation5], 1024
    $region125: #{dense_att_core_forward.1} parent=1 // pred_fallthru
      _
    // Predicated region
    $region126: #{dense_att_core_forward.1} parent=1 // pred_check
      _
    $region127: #{dense_att_core_forward.1} parent=1 // pred_check_branch
      %240 = sbr.rel (0) target = $region129
    $region128: #{dense_att_core_forward.1} parent=1 // pred_region
      %242 = dma.done [#allocation8], 512
    $region129: #{dense_att_core_forward.1} parent=1 // pred_fallthru
      _
    // Predicated region
    $region130: #{dense_att_core_forward.1} parent=1 // pred_check
      _
    $region131: #{dense_att_core_forward.1} parent=1 // pred_check_branch
      %244 = sbr.rel (0) target = $region133
    $region132: #{dense_att_core_forward.1} parent=1 // pred_region
      %246 = dma.done [#allocation8], 512
    $region133: #{dense_att_core_forward.1} parent=1 // pred_fallthru
      _
    // Predicated region
    $region134: #{dense_att_core_forward.1} parent=1 // pred_check
      _
    $region135: #{dense_att_core_forward.1} parent=1 // pred_check_branch
      %248 = sbr.rel (0) target = $region137
    $region136: #{dense_att_core_forward.1} parent=1 // pred_region
      %250 = dma.done [#allocation11], 1024
    $region137: #{dense_att_core_forward.1} parent=1 // pred_fallthru
      _
    // Predicated region
    $region138: #{dense_att_core_forward.1} parent=1 // pred_check
      _
    $region139: #{dense_att_core_forward.1} parent=1 // pred_check_branch
      %252 = sbr.rel (0) target = $region141
    $region140: #{dense_att_core_forward.1} parent=1 // pred_region
      %254 = dma.done [#allocation11], 1024
    $region141: #{dense_att_core_forward.1} parent=1 // pred_fallthru
      _
    // Predicated region
    $region142: #{dense_att_core_forward.1} parent=1 // pred_check
      _
    $region143: #{dense_att_core_forward.1} parent=1 // pred_check_branch
      %256 = sbr.rel (0) target = $region145
    $region144: #{dense_att_core_forward.1} parent=1 // pred_region
      %258 = dma.done [#allocation14], 1024
    $region145: #{dense_att_core_forward.1} parent=1 // pred_fallthru
      _
    // Predicated region
    $region146: #{dense_att_core_forward.1} parent=1 // pred_check
      _
    $region147: #{dense_att_core_forward.1} parent=1 // pred_check_branch
      %260 = sbr.rel (0) target = $region149
    $region148: #{dense_att_core_forward.1} parent=1 // pred_region
      %262 = dma.done [#allocation14], 512
    $region149: #{dense_att_core_forward.1} parent=1 // pred_fallthru
      _
    %v263 = vld [vmem:[%s5] sm:$0xff]
    %v264 = vld [vmem:[%s5 + $0x8] sm:$0xff]
    %v265 = vld [vmem:[%s5 + $0x10] sm:$0xff]
    %v266 = vld [vmem:[%s5 + $0x18] sm:$0xff]
    %v267 = vld [vmem:[%s5 + $0x20] sm:$0xff]
    %v268 = vld [vmem:[%s5 + $0x28] sm:$0xff]
    %v269 = vld [vmem:[%s5 + $0x30] sm:$0xff]
    %v270 = vld [vmem:[%s5 + $0x38] sm:$0xff]
    %v271 = vld [vmem:[%s7] sm:$0xff]
    %v272 = vld [vmem:[%s7 + $0x8] sm:$0xff]
    %v273 = vld [vmem:[%s7 + $0x10] sm:$0xff]
    %v274 = vld [vmem:[%s7 + $0x18] sm:$0xff]
    %v275 = vld [vmem:[%s7 + $0x20] sm:$0xff]
    %v276 = vld [vmem:[%s7 + $0x28] sm:$0xff]
    %v277 = vld [vmem:[%s7 + $0x30] sm:$0xff]
    %v278 = vld [vmem:[%s7 + $0x38] sm:$0xff]
    %v279 = vld [vmem:[%s1] sm:$0xff]
    %v280 = vld [vmem:[%s13] sm:$0xff]
    %v281 = vld [vmem:[%s13 + $0x8] sm:$0xff]
    %v282 = vld [vmem:[%s13 + $0x10] sm:$0xff]
    %v283 = vld [vmem:[%s13 + $0x18] sm:$0xff]
    %v284 = vld [vmem:[%s3] sm:$0xff]
    %v285 = vld [vmem:[%s15] sm:$0xff]
    %v286 = vld [vmem:[%s15 + $0x8] sm:$0xff]
    %v287 = vld [vmem:[%s15 + $0x10] sm:$0xff]
    %v288 = vld [vmem:[%s15 + $0x18] sm:$0xff]
    %v289 = vld [vmem:[%s15 + $0x20] sm:$0xff]
    %v290 = vld [vmem:[%s15 + $0x28] sm:$0xff]
    %v291 = vld [vmem:[%s15 + $0x30] sm:$0xff]
    %v292 = vld [vmem:[%s15 + $0x38] sm:$0xff]
    %vm293 = vcmask 261120
    %v295 = vsel %vm293, %v284, 0
    %297 = vmatpush.msra.mxu0 0.0
    %298 = vmatpush.msra.mxu0 0.0
    %299 = vmatpush.msra.mxu0 0.0
    %300 = vmatpush.msra.mxu0 0.0
    %301 = vmatpush.msra.mxu0 0.0
    %302 = vmatpush.msra.mxu0 0.0
    %303 = vmatpush.msra.mxu0 0.0
    %304 = vmatpush.msra.mxu0 0.0
    %305 = vmatpush.msra.mxu0 0.0
    %306 = vmatpush.msra.mxu0 0.0
    %307 = vmatpush.msra.mxu0 0.0
    %308 = vmatpush.msra.mxu0 0.0
    %309 = vmatpush.msra.mxu0 %v291
    %310 = vmatpush.msra.mxu0 %v289
    %311 = vmatpush.msra.mxu0 %v287
    %312 = vmatpush.msra.mxu0 %v285
    %313 = vmatmul.f32.gmra.mxu0 %v295
    %v314 = vpop.f32.mrf.mxu0
    %v315 = vadd.f32 0.0, %v314
    %316 = vdwg.mxu0
    %317 = vmatpush.msra.mxu0 0.0
    %318 = vmatpush.msra.mxu0 0.0
    %319 = vmatpush.msra.mxu0 0.0
    %320 = vmatpush.msra.mxu0 0.0
    %321 = vmatpush.msra.mxu0 0.0
    %322 = vmatpush.msra.mxu0 0.0
    %323 = vmatpush.msra.mxu0 0.0
    %324 = vmatpush.msra.mxu0 0.0
    %325 = vmatpush.msra.mxu0 0.0
    %326 = vmatpush.msra.mxu0 0.0
    %327 = vmatpush.msra.mxu0 0.0
    %328 = vmatpush.msra.mxu0 0.0
    %329 = vmatpush.msra.mxu0 %v292
    %330 = vmatpush.msra.mxu0 %v290
    %331 = vmatpush.msra.mxu0 %v288
    %332 = vmatpush.msra.mxu0 %v286
    %333 = vmatmul.f32.gmra.mxu0 %v295
    %v334 = vpop.f32.mrf.mxu0
    %v335 = vadd.f32 0.0, %v334
    %336 = vdwg.mxu0
    %vm337 = vcmask 130048
    %v339 = vsel %vm337, %v279, 0
    %341 = vmatpush.msra.mxu0 0.0
    %342 = vmatpush.msra.mxu0 0.0
    %343 = vmatpush.msra.mxu0 0.0
    %344 = vmatpush.msra.mxu0 0.0
    %345 = vmatpush.msra.mxu0 0.0
    %346 = vmatpush.msra.mxu0 0.0
    %347 = vmatpush.msra.mxu0 0.0
    %348 = vmatpush.msra.mxu0 0.0
    %349 = vmatpush.msra.mxu0 0.0
    %350 = vmatpush.msra.mxu0 0.0
    %351 = vmatpush.msra.mxu0 0.0
    %352 = vmatpush.msra.mxu0 0.0
    %353 = vmatpush.msra.mxu0 0.0
    %354 = vmatpush.msra.mxu0 0.0
    %355 = vmatpush.msra.mxu0 %v282
    %356 = vmatpush.msra.mxu0 %v280
    %357 = vmatmul.f32.gmra.mxu0 %v339
    %v358 = vpop.f32.mrf.mxu0
    %v359 = vadd.f32 %v315, %v358
    %360 = vdwg.mxu0
    %361 = vmatpush.msra.mxu0 0.0
    %362 = vmatpush.msra.mxu0 0.0
    %363 = vmatpush.msra.mxu0 0.0
    %364 = vmatpush.msra.mxu0 0.0
    %365 = vmatpush.msra.mxu0 0.0
    %366 = vmatpush.msra.mxu0 0.0
    %367 = vmatpush.msra.mxu0 0.0
    %368 = vmatpush.msra.mxu0 0.0
    %369 = vmatpush.msra.mxu0 0.0
    %370 = vmatpush.msra.mxu0 0.0
    %371 = vmatpush.msra.mxu0 0.0
    %372 = vmatpush.msra.mxu0 0.0
    %373 = vmatpush.msra.mxu0 0.0
    %374 = vmatpush.msra.mxu0 0.0
    %375 = vmatpush.msra.mxu0 %v283
    %376 = vmatpush.msra.mxu0 %v281
    %377 = vmatmul.f32.gmra.mxu0 %v339
    %v378 = vpop.f32.mrf.mxu0
    %v379 = vadd.f32 %v335, %v378
    %380 = vdwg.mxu0
    %v381 = vld [vmem:[%s9] sm:$0xff]
    %v382 = vld [vmem:[%s19] sm:$0xff]
    %v383 = vld [vmem:[%s19 + $0x8] sm:$0xff]
    %v384 = vld [vmem:[%s19 + $0x10] sm:$0xff]
    %v385 = vld [vmem:[%s19 + $0x18] sm:$0xff]
    %v386 = vld [vmem:[%s19 + $0x20] sm:$0xff]
    %v387 = vld [vmem:[%s19 + $0x28] sm:$0xff]
    %v388 = vld [vmem:[%s19 + $0x30] sm:$0xff]
    %v389 = vld [vmem:[%s19 + $0x38] sm:$0xff]
    %v391 = vsel %vm293, %v381, 0
    %393 = vmatpush.msra.mxu0 0.0
    %394 = vmatpush.msra.mxu0 0.0
    %395 = vmatpush.msra.mxu0 0.0
    %396 = vmatpush.msra.mxu0 0.0
    %397 = vmatpush.msra.mxu0 0.0
    %398 = vmatpush.msra.mxu0 0.0
    %399 = vmatpush.msra.mxu0 0.0
    %400 = vmatpush.msra.mxu0 0.0
    %401 = vmatpush.msra.mxu0 0.0
    %402 = vmatpush.msra.mxu0 0.0
    %403 = vmatpush.msra.mxu0 0.0
    %404 = vmatpush.msra.mxu0 0.0
    %405 = vmatpush.msra.mxu0 %v388
    %406 = vmatpush.msra.mxu0 %v386
    %407 = vmatpush.msra.mxu0 %v384
    %408 = vmatpush.msra.mxu0 %v382
    %409 = vmatmul.f32.gmra.mxu0 %v391
    %v410 = vpop.f32.mrf.mxu0
    %v411 = vadd.f32 0.0, %v410
    %412 = vdwg.mxu0
    %413 = vmatpush.msra.mxu0 0.0
    %414 = vmatpush.msra.mxu0 0.0
    %415 = vmatpush.msra.mxu0 0.0
    %416 = vmatpush.msra.mxu0 0.0
    %417 = vmatpush.msra.mxu0 0.0
    %418 = vmatpush.msra.mxu0 0.0
    %419 = vmatpush.msra.mxu0 0.0
    %420 = vmatpush.msra.mxu0 0.0
    %421 = vmatpush.msra.mxu0 0.0
    %422 = vmatpush.msra.mxu0 0.0
    %423 = vmatpush.msra.mxu0 0.0
    %424 = vmatpush.msra.mxu0 0.0
    %425 = vmatpush.msra.mxu0 %v389
    %426 = vmatpush.msra.mxu0 %v387
    %427 = vmatpush.msra.mxu0 %v385
    %428 = vmatpush.msra.mxu0 %v383
    %429 = vmatmul.f32.gmra.mxu0 %v391
    %v430 = vpop.f32.mrf.mxu0
    %v431 = vadd.f32 0.0, %v430
    %432 = vdwg.mxu0
    %v433 = vadd.f32 %v359, %v411
    %v434 = vadd.f32 %v379, %v431
    %v435 = vld [vmem:[%s17] sm:$0x3]
    %v437 = vperm.slane %v435, 0
    %v438 = vperm.slane %v435, 1
    %v441 = vadd.f32 %v433, %v437
    %v442 = vadd.f32 %v434, %v438
    %v443 = vld [vmem:[%s11] sm:$0xff]
    %v444 = vxor.u32 %v441, 2147483648
    %v445 = vmul.f32 %v444, 1.442695
    %v446 = vpow.pop %v445
    %v447 = vadd.f32 %v446, 1.0
    %v448 = vrcp.pop %v447
    %v449 = vmul.f32 %v447, %v448
    %v450 = vsub.f32 1.0, %v449
    %v451 = vmul.f32 %v448, %v450
    %v452 = vadd.f32 %v448, %v451
    %vm453 = vweird.f32 %v447
    %vm454 = vweird.f32 %v448
    %vm455 = vmor %vm453, %vm454
    %v456 = vsel %vm455, %v448, %v452
    %v457 = vand.u32 2147483647, %v447
    %vm458 = vcmp.eq.f32.partialorder %v457, 8.507059e+37
    %v459 = vand.u32 %v447, 2147483648
    %v460 = vor.u32 1.1754944e-38, %v459
    %v461 = vsel %vm458, %v460, %v456
    %v462 = vmul.f32 1.0, %v461
    %464 = vrot.lane.b32.xlu0 %v442, 96
    %v465 = vpop.permute.xlu0 %464
    %v467 = vmax.f32 %v441, %v465
    %469 = vrot.lane.b32.xlu0 %v443, 32
    %v470 = vpop.permute.xlu0 %469
    %v472 = vmul.f32 %v462, %v470
    %474 = vrot.lane.b32.xlu0 %v467, 32
    %v475 = vpop.permute.xlu0 %474
    %v477 = vmul.f32 %v462, %v475
    %479 = vrot.lane.b32.xlu0 %v477, 32
    %v480 = vpop.permute.xlu0 %479
    %v482 = vadd.f32 %v472, %v480
    %v483 = vtanh.pop %v482
    %485 = vrot.lane.b32.xlu0 %v483, 32
    %v486 = vpop.permute.xlu0 %485
    %v488 = vmul.f32 %v462, %v486
    %490 = vrot.lane.b32.xlu0 %v488, 64
    %v491 = vpop.permute.xlu0 %490
    %493 = vst.msk [vmem:[%s59] sm:$0xff] %vm293, %v491
    %495 = vrot.lane.b32.xlu0 %v482, 96
    %v496 = vpop.permute.xlu0 %495
    %498 = vst.msk [vmem:[%s61] sm:$0xff] %vm293, %v496
    %v499 = vld [vmem:[#allocation2] sm:$0xff]
    %v500 = vld [vmem:[#allocation2 + $0x8] sm:$0xff]
    %v501 = vld [vmem:[#allocation2 + $0x10] sm:$0xff]
    %v502 = vld [vmem:[#allocation2 + $0x18] sm:$0xff]
    %v503 = vld [vmem:[#allocation2 + $0x20] sm:$0xff]
    %v504 = vld [vmem:[#allocation2 + $0x28] sm:$0xff]
    %v505 = vld [vmem:[#allocation2 + $0x30] sm:$0xff]
    %v506 = vld [vmem:[#allocation2 + $0x38] sm:$0xff]
    %v507 = vsel %vm293, %v491, 0
    %509 = vmatpush.msra.mxu0 0.0
    %510 = vmatpush.msra.mxu0 0.0
    %511 = vmatpush.msra.mxu0 0.0
    %512 = vmatpush.msra.mxu0 0.0
    %513 = vmatpush.msra.mxu0 0.0
    %514 = vmatpush.msra.mxu0 0.0
    %515 = vmatpush.msra.mxu0 0.0
    %516 = vmatpush.msra.mxu0 0.0
    %517 = vmatpush.msra.mxu0 0.0
    %518 = vmatpush.msra.mxu0 0.0
    %519 = vmatpush.msra.mxu0 0.0
    %520 = vmatpush.msra.mxu0 0.0
    %521 = vmatpush.msra.mxu0 %v505
    %522 = vmatpush.msra.mxu0 %v503
    %523 = vmatpush.msra.mxu0 %v501
    %524 = vmatpush.msra.mxu0 %v499
    %525 = vmatmul.f32.gmra.mxu0 %v507
    %v526 = vpop.f32.mrf.mxu0
    %v527 = vadd.f32 0.0, %v526
    %528 = vdwg.mxu0
    %529 = vmatpush.msra.mxu0 0.0
    %530 = vmatpush.msra.mxu0 0.0
    %531 = vmatpush.msra.mxu0 0.0
    %532 = vmatpush.msra.mxu0 0.0
    %533 = vmatpush.msra.mxu0 0.0
    %534 = vmatpush.msra.mxu0 0.0
    %535 = vmatpush.msra.mxu0 0.0
    %536 = vmatpush.msra.mxu0 0.0
    %537 = vmatpush.msra.mxu0 0.0
    %538 = vmatpush.msra.mxu0 0.0
    %539 = vmatpush.msra.mxu0 0.0
    %540 = vmatpush.msra.mxu0 0.0
    %541 = vmatpush.msra.mxu0 %v506
    %542 = vmatpush.msra.mxu0 %v504
    %543 = vmatpush.msra.mxu0 %v502
    %544 = vmatpush.msra.mxu0 %v500
    %545 = vmatmul.f32.gmra.mxu0 %v507
    %v546 = vpop.f32.mrf.mxu0
    %v547 = vadd.f32 0.0, %v546
    %548 = vdwg.mxu0
    %v549 = vld [vmem:[%s23] sm:$0x1]
    %v551 = vperm.slane %v549, 0
    %552 = vrot.lane.b32.xlu0 %v551, 96
    %v553 = vpop.permute.xlu0 %552
    %v555 = vadd.f32 %v547, %v553
    %v557 = vrot.slane %v555, 1
    %v558 = vrot.slane %v555, 2
    %v559 = vrot.slane %v555, 3
    %v560 = vrot.slane %v555, 4
    %v561 = vrot.slane %v555, 5
    %v562 = vrot.slane %v555, 6
    %v563 = vrot.slane %v555, 7
    %v564 = vperm.slane %v555, 0
    %v565 = vperm.slane %v557, 0
    %v566 = vperm.slane %v558, 0
    %v567 = vperm.slane %v559, 0
    %v568 = vperm.slane %v560, 0
    %v569 = vperm.slane %v561, 0
    %v570 = vperm.slane %v562, 0
    %v571 = vperm.slane %v563, 0
    %572 = vrot.lane.b32.xlu0 %v564, 32
    %v573 = vpop.permute.xlu0 %572
    %574 = vrot.lane.b32.xlu0 %v565, 32
    %v575 = vpop.permute.xlu0 %574
    %576 = vrot.lane.b32.xlu0 %v566, 32
    %v577 = vpop.permute.xlu0 %576
    %578 = vrot.lane.b32.xlu0 %v567, 32
    %v579 = vpop.permute.xlu0 %578
    %580 = vrot.lane.b32.xlu0 %v568, 32
    %v581 = vpop.permute.xlu0 %580
    %582 = vrot.lane.b32.xlu0 %v569, 32
    %v583 = vpop.permute.xlu0 %582
    %584 = vrot.lane.b32.xlu0 %v570, 32
    %v585 = vpop.permute.xlu0 %584
    %586 = vrot.lane.b32.xlu0 %v571, 32
    %v587 = vpop.permute.xlu0 %586
    %v596 = vadd.f32 %v271, %v573
    %v597 = vadd.f32 %v272, %v575
    %v598 = vadd.f32 %v273, %v577
    %v599 = vadd.f32 %v274, %v579
    %v600 = vadd.f32 %v275, %v581
    %v601 = vadd.f32 %v276, %v583
    %v602 = vadd.f32 %v277, %v585
    %v603 = vadd.f32 %v278, %v587
    %v604 = vtanh.pop %v596
    %v605 = vtanh.pop %v597
    %v606 = vtanh.pop %v598
    %v607 = vtanh.pop %v599
    %v608 = vtanh.pop %v600
    %v609 = vtanh.pop %v601
    %v610 = vtanh.pop %v602
    %v611 = vtanh.pop %v603
    %v612 = vld [vmem:[%s25] sm:$0x1]
    %v614 = vperm.slane %v612, 0
    %v616 = vmul.f32 %v604, %v614
    %v617 = vmul.f32 %v605, %v614
    %v618 = vmul.f32 %v606, %v614
    %v619 = vmul.f32 %v607, %v614
    %v620 = vmul.f32 %v608, %v614
    %v621 = vmul.f32 %v609, %v614
    %v622 = vmul.f32 %v610, %v614
    %v623 = vmul.f32 %v611, %v614
    %v624 = vsel %vm293, %v616, 0.0
    %625 = vadd.xlane.f32.xlu0 %v624
    %v626 = vpop.xlane.xlu0 %625
    %v627 = vsel %vm293, %v617, 0.0
    %628 = vadd.xlane.f32.xlu0 %v627
    %v629 = vpop.xlane.xlu0 %628
    %v630 = vsel %vm293, %v618, 0.0
    %631 = vadd.xlane.f32.xlu0 %v630
    %v632 = vpop.xlane.xlu0 %631
    %v633 = vsel %vm293, %v619, 0.0
    %634 = vadd.xlane.f32.xlu0 %v633
    %v635 = vpop.xlane.xlu0 %634
    %v636 = vsel %vm293, %v620, 0.0
    %637 = vadd.xlane.f32.xlu0 %v636
    %v638 = vpop.xlane.xlu0 %637
    %v639 = vsel %vm293, %v621, 0.0
    %640 = vadd.xlane.f32.xlu0 %v639
    %v641 = vpop.xlane.xlu0 %640
    %v642 = vsel %vm293, %v622, 0.0
    %643 = vadd.xlane.f32.xlu0 %v642
    %v644 = vpop.xlane.xlu0 %643
    %v645 = vsel %vm293, %v623, 0.0
    %646 = vadd.xlane.f32.xlu0 %v645
    %v647 = vpop.xlane.xlu0 %646
    %v656 = vlaneseq
    %v657 = vand.u32 %v656, 127
    %v658 = vperm.slane %v626, %v657
    %v659 = vperm.slane %v629, %v657
    %v660 = vperm.slane %v632, %v657
    %v661 = vperm.slane %v635, %v657
    %v662 = vperm.slane %v638, %v657
    %v663 = vperm.slane %v641, %v657
    %v664 = vperm.slane %v644, %v657
    %v665 = vperm.slane %v647, %v657
    %vm666 = vcmask 1041409
    %v667 = vsel %vm666, %v659, %v658
    %vm668 = vcmask 1042434
    %v669 = vsel %vm668, %v660, %v667
    %vm670 = vcmask 1043459
    %v671 = vsel %vm670, %v661, %v669
    %vm672 = vcmask 1044484
    %v673 = vsel %vm672, %v662, %v671
    %vm674 = vcmask 1045509
    %v675 = vsel %vm674, %v663, %v673
    %vm676 = vcmask 1046534
    %v677 = vsel %vm676, %v664, %v675
    %vm678 = vcmask 1047559
    %v679 = vsel %vm678, %v665, %v677
    %vm681 = vcmask 64512
    %v682 = vsel %vm681, %v679, -inf
    %683 = vmax.xlane.f32.xlu0 %v682
    %v684 = vpop.xlane.xlu0 %683
    %v686 = vperm.slane %v684, 0
    %v687 = vperm.slane %v684, 1
    %v688 = vperm.slane %v684, 2
    %v689 = vperm.slane %v684, 3
    %v690 = vperm.slane %v684, 4
    %v691 = vperm.slane %v684, 5
    %v692 = vperm.slane %v684, 6
    %v693 = vperm.slane %v684, 7
    %v702 = vsub.f32 %v626, %v686
    %v703 = vsub.f32 %v629, %v687
    %v704 = vsub.f32 %v632, %v688
    %v705 = vsub.f32 %v635, %v689
    %v706 = vsub.f32 %v638, %v690
    %v707 = vsub.f32 %v641, %v691
    %v708 = vsub.f32 %v644, %v692
    %v709 = vsub.f32 %v647, %v693
    %v710 = vmul.f32 %v702, 1.442695
    %v711 = vpow.pop %v710
    %v712 = vmul.f32 %v703, 1.442695
    %v713 = vpow.pop %v712
    %v714 = vmul.f32 %v704, 1.442695
    %v715 = vpow.pop %v714
    %v716 = vmul.f32 %v705, 1.442695
    %v717 = vpow.pop %v716
    %v718 = vmul.f32 %v706, 1.442695
    %v719 = vpow.pop %v718
    %v720 = vmul.f32 %v707, 1.442695
    %v721 = vpow.pop %v720
    %v722 = vmul.f32 %v708, 1.442695
    %v723 = vpow.pop %v722
    %v724 = vmul.f32 %v709, 1.442695
    %v725 = vpow.pop %v724
    %734 = vset.pattern.permute.xlu0 0
    %735 = vperm.xlu0 %734, %v711
    %v736 = vpop.permute.xlu0 %735
    %737 = vset.pattern.permute.xlu0 0
    %738 = vperm.xlu0 %737, %v713
    %v739 = vpop.permute.xlu0 %738
    %740 = vset.pattern.permute.xlu0 0
    %741 = vperm.xlu0 %740, %v715
    %v742 = vpop.permute.xlu0 %741
    %743 = vset.pattern.permute.xlu0 0
    %744 = vperm.xlu0 %743, %v717
    %v745 = vpop.permute.xlu0 %744
    %746 = vset.pattern.permute.xlu0 0
    %747 = vperm.xlu0 %746, %v719
    %v748 = vpop.permute.xlu0 %747
    %749 = vset.pattern.permute.xlu0 0
    %750 = vperm.xlu0 %749, %v721
    %v751 = vpop.permute.xlu0 %750
    %752 = vset.pattern.permute.xlu0 0
    %753 = vperm.xlu0 %752, %v723
    %v754 = vpop.permute.xlu0 %753
    %755 = vset.pattern.permute.xlu0 0
    %756 = vperm.xlu0 %755, %v725
    %v757 = vpop.permute.xlu0 %756
    %v758 = vperm.slane %v736, %v657
    %v759 = vperm.slane %v739, %v657
    %v760 = vperm.slane %v742, %v657
    %v761 = vperm.slane %v745, %v657
    %v762 = vperm.slane %v748, %v657
    %v763 = vperm.slane %v751, %v657
    %v764 = vperm.slane %v754, %v657
    %v765 = vperm.slane %v757, %v657
    %v766 = vsel %vm666, %v759, %v758
    %v767 = vsel %vm668, %v760, %v766
    %v768 = vsel %vm670, %v761, %v767
    %v769 = vsel %vm672, %v762, %v768
    %v770 = vsel %vm674, %v763, %v769
    %v771 = vsel %vm676, %v764, %v770
    %v772 = vsel %vm678, %v765, %v771
    %v774 = vsel %vm681, %v772, 0.0
    %775 = vadd.xlane.f32.xlu0 %v774
    %v776 = vpop.xlane.xlu0 %775
    %v778 = vperm.slane %v776, 0
    %v779 = vperm.slane %v776, 1
    %v780 = vperm.slane %v776, 2
    %v781 = vperm.slane %v776, 3
    %v782 = vperm.slane %v776, 4
    %v783 = vperm.slane %v776, 5
    %v784 = vperm.slane %v776, 6
    %v785 = vperm.slane %v776, 7
    %v794 = vrcp.pop %v778
    %v795 = vmul.f32 %v778, %v794
    %v796 = vsub.f32 1.0, %v795
    %v797 = vmul.f32 %v794, %v796
    %v798 = vadd.f32 %v794, %v797
    %vm799 = vweird.f32 %v778
    %vm800 = vweird.f32 %v794
    %vm801 = vmor %vm799, %vm800
    %v802 = vsel %vm801, %v794, %v798
    %v803 = vand.u32 2147483647, %v778
    %vm804 = vcmp.eq.f32.partialorder %v803, 8.507059e+37
    %v805 = vand.u32 %v778, 2147483648
    %v806 = vor.u32 1.1754944e-38, %v805
    %v807 = vsel %vm804, %v806, %v802
    %v808 = vmul.f32 %v711, %v807
    %v809 = vrcp.pop %v779
    %v810 = vmul.f32 %v779, %v809
    %v811 = vsub.f32 1.0, %v810
    %v812 = vmul.f32 %v809, %v811
    %v813 = vadd.f32 %v809, %v812
    %vm814 = vweird.f32 %v779
    %vm815 = vweird.f32 %v809
    %vm816 = vmor %vm814, %vm815
    %v817 = vsel %vm816, %v809, %v813
    %v818 = vand.u32 2147483647, %v779
    %vm819 = vcmp.eq.f32.partialorder %v818, 8.507059e+37
    %v820 = vand.u32 %v779, 2147483648
    %v821 = vor.u32 1.1754944e-38, %v820
    %v822 = vsel %vm819, %v821, %v817
    %v823 = vmul.f32 %v713, %v822
    %v824 = vrcp.pop %v780
    %v825 = vmul.f32 %v780, %v824
    %v826 = vsub.f32 1.0, %v825
    %v827 = vmul.f32 %v824, %v826
    %v828 = vadd.f32 %v824, %v827
    %vm829 = vweird.f32 %v780
    %vm830 = vweird.f32 %v824
    %vm831 = vmor %vm829, %vm830
    %v832 = vsel %vm831, %v824, %v828
    %v833 = vand.u32 2147483647, %v780
    %vm834 = vcmp.eq.f32.partialorder %v833, 8.507059e+37
    %v835 = vand.u32 %v780, 2147483648
    %v836 = vor.u32 1.1754944e-38, %v835
    %v837 = vsel %vm834, %v836, %v832
    %v838 = vmul.f32 %v715, %v837
    %v839 = vrcp.pop %v781
    %v840 = vmul.f32 %v781, %v839
    %v841 = vsub.f32 1.0, %v840
    %v842 = vmul.f32 %v839, %v841
    %v843 = vadd.f32 %v839, %v842
    %vm844 = vweird.f32 %v781
    %vm845 = vweird.f32 %v839
    %vm846 = vmor %vm844, %vm845
    %v847 = vsel %vm846, %v839, %v843
    %v848 = vand.u32 2147483647, %v781
    %vm849 = vcmp.eq.f32.partialorder %v848, 8.507059e+37
    %v850 = vand.u32 %v781, 2147483648
    %v851 = vor.u32 1.1754944e-38, %v850
    %v852 = vsel %vm849, %v851, %v847
    %v853 = vmul.f32 %v717, %v852
    %v854 = vrcp.pop %v782
    %v855 = vmul.f32 %v782, %v854
    %v856 = vsub.f32 1.0, %v855
    %v857 = vmul.f32 %v854, %v856
    %v858 = vadd.f32 %v854, %v857
    %vm859 = vweird.f32 %v782
    %vm860 = vweird.f32 %v854
    %vm861 = vmor %vm859, %vm860
    %v862 = vsel %vm861, %v854, %v858
    %v863 = vand.u32 2147483647, %v782
    %vm864 = vcmp.eq.f32.partialorder %v863, 8.507059e+37
    %v865 = vand.u32 %v782, 2147483648
    %v866 = vor.u32 1.1754944e-38, %v865
    %v867 = vsel %vm864, %v866, %v862
    %v868 = vmul.f32 %v719, %v867
    %v869 = vrcp.pop %v783
    %v870 = vmul.f32 %v783, %v869
    %v871 = vsub.f32 1.0, %v870
    %v872 = vmul.f32 %v869, %v871
    %v873 = vadd.f32 %v869, %v872
    %vm874 = vweird.f32 %v783
    %vm875 = vweird.f32 %v869
    %vm876 = vmor %vm874, %vm875
    %v877 = vsel %vm876, %v869, %v873
    %v878 = vand.u32 2147483647, %v783
    %vm879 = vcmp.eq.f32.partialorder %v878, 8.507059e+37
    %v880 = vand.u32 %v783, 2147483648
    %v881 = vor.u32 1.1754944e-38, %v880
    %v882 = vsel %vm879, %v881, %v877
    %v883 = vmul.f32 %v721, %v882
    %v884 = vrcp.pop %v784
    %v885 = vmul.f32 %v784, %v884
    %v886 = vsub.f32 1.0, %v885
    %v887 = vmul.f32 %v884, %v886
    %v888 = vadd.f32 %v884, %v887
    %vm889 = vweird.f32 %v784
    %vm890 = vweird.f32 %v884
    %vm891 = vmor %vm889, %vm890
    %v892 = vsel %vm891, %v884, %v888
    %v893 = vand.u32 2147483647, %v784
    %vm894 = vcmp.eq.f32.partialorder %v893, 8.507059e+37
    %v895 = vand.u32 %v784, 2147483648
    %v896 = vor.u32 1.1754944e-38, %v895
    %v897 = vsel %vm894, %v896, %v892
    %v898 = vmul.f32 %v723, %v897
    %v899 = vrcp.pop %v785
    %v900 = vmul.f32 %v785, %v899
    %v901 = vsub.f32 1.0, %v900
    %v902 = vmul.f32 %v899, %v901
    %v903 = vadd.f32 %v899, %v902
    %vm904 = vweird.f32 %v785
    %vm905 = vweird.f32 %v899
    %vm906 = vmor %vm904, %vm905
    %v907 = vsel %vm906, %v899, %v903
    %v908 = vand.u32 2147483647, %v785
    %vm909 = vcmp.eq.f32.partialorder %v908, 8.507059e+37
    %v910 = vand.u32 %v785, 2147483648
    %v911 = vor.u32 1.1754944e-38, %v910
    %v912 = vsel %vm909, %v911, %v907
    %v913 = vmul.f32 %v725, %v912
    %915 = vset.pattern.permute.xlu0 0
    %916 = vperm.xlu0 %915, %v808
    %v917 = vpop.permute.xlu0 %916
    %920 = vset.pattern.permute.xlu0 0
    %921 = vperm.xlu0 %920, %v823
    %v922 = vpop.permute.xlu0 %921
    %925 = vset.pattern.permute.xlu0 0
    %926 = vperm.xlu0 %925, %v838
    %v927 = vpop.permute.xlu0 %926
    %930 = vset.pattern.permute.xlu0 0
    %931 = vperm.xlu0 %930, %v853
    %v932 = vpop.permute.xlu0 %931
    %935 = vset.pattern.permute.xlu0 0
    %936 = vperm.xlu0 %935, %v868
    %v937 = vpop.permute.xlu0 %936
    %940 = vset.pattern.permute.xlu0 0
    %941 = vperm.xlu0 %940, %v883
    %v942 = vpop.permute.xlu0 %941
    %945 = vset.pattern.permute.xlu0 0
    %946 = vperm.xlu0 %945, %v898
    %v947 = vpop.permute.xlu0 %946
    %950 = vset.pattern.permute.xlu0 0
    %951 = vperm.xlu0 %950, %v913
    %v952 = vpop.permute.xlu0 %951
    %v954 = vmul.f32 %v917, %v263
    %v955 = vmul.f32 %v922, %v264
    %v956 = vmul.f32 %v927, %v265
    %v957 = vmul.f32 %v932, %v266
    %v958 = vmul.f32 %v937, %v267
    %v959 = vmul.f32 %v942, %v268
    %v960 = vmul.f32 %v947, %v269
    %v961 = vmul.f32 %v952, %v270
    %v962 = vsel %vm293, %v954, 0.0
    %v963 = vrot.slane %v962, 4
    %v964 = vadd.f32 %v962, %v963
    %v965 = vrot.slane %v964, 2
    %v966 = vadd.f32 %v964, %v965
    %v967 = vrot.slane %v966, 1
    %v968 = vadd.f32 %v966, %v967
    %v969 = vsel %vm293, %v955, 0.0
    %v970 = vrot.slane %v969, 4
    %v971 = vadd.f32 %v969, %v970
    %v972 = vrot.slane %v971, 2
    %v973 = vadd.f32 %v971, %v972
    %v974 = vrot.slane %v973, 1
    %v975 = vadd.f32 %v973, %v974
    %v976 = vsel %vm293, %v956, 0.0
    %v977 = vrot.slane %v976, 4
    %v978 = vadd.f32 %v976, %v977
    %v979 = vrot.slane %v978, 2
    %v980 = vadd.f32 %v978, %v979
    %v981 = vrot.slane %v980, 1
    %v982 = vadd.f32 %v980, %v981
    %v983 = vsel %vm293, %v957, 0.0
    %v984 = vrot.slane %v983, 4
    %v985 = vadd.f32 %v983, %v984
    %v986 = vrot.slane %v985, 2
    %v987 = vadd.f32 %v985, %v986
    %v988 = vrot.slane %v987, 1
    %v989 = vadd.f32 %v987, %v988
    %v990 = vsel %vm293, %v958, 0.0
    %v991 = vrot.slane %v990, 4
    %v992 = vadd.f32 %v990, %v991
    %v993 = vrot.slane %v992, 2
    %v994 = vadd.f32 %v992, %v993
    %v995 = vrot.slane %v994, 1
    %v996 = vadd.f32 %v994, %v995
    %v997 = vsel %vm293, %v959, 0.0
    %v998 = vrot.slane %v997, 4
    %v999 = vadd.f32 %v997, %v998
    %v1000 = vrot.slane %v999, 2
    %v1001 = vadd.f32 %v999, %v1000
    %v1002 = vrot.slane %v1001, 1
    %v1003 = vadd.f32 %v1001, %v1002
    %v1004 = vsel %vm293, %v960, 0.0
    %v1005 = vrot.slane %v1004, 4
    %v1006 = vadd.f32 %v1004, %v1005
    %v1007 = vrot.slane %v1006, 2
    %v1008 = vadd.f32 %v1006, %v1007
    %v1009 = vrot.slane %v1008, 1
    %v1010 = vadd.f32 %v1008, %v1009
    %v1011 = vsel %vm293, %v961, 0.0
    %v1012 = vrot.slane %v1011, 4
    %v1013 = vadd.f32 %v1011, %v1012
    %v1014 = vrot.slane %v1013, 2
    %v1015 = vadd.f32 %v1013, %v1014
    %v1016 = vrot.slane %v1015, 1
    %v1017 = vadd.f32 %v1015, %v1016
    %v1018 = vld [vmem:[#allocation4] sm:$0xff]
    %v1019 = vld [vmem:[#allocation4 + $0x8] sm:$0xff]
    %v1020 = vld [vmem:[#allocation4 + $0x10] sm:$0xff]
    %v1021 = vld [vmem:[#allocation4 + $0x18] sm:$0xff]
    %v1022 = vld [vmem:[#allocation4 + $0x20] sm:$0xff]
    %v1023 = vld [vmem:[#allocation4 + $0x28] sm:$0xff]
    %v1024 = vld [vmem:[#allocation4 + $0x30] sm:$0xff]
    %v1025 = vld [vmem:[#allocation4 + $0x38] sm:$0xff]
    %v1034 = vsel %vm666, %v975, %v968
    %v1035 = vsel %vm668, %v982, %v1034
    %v1036 = vsel %vm670, %v989, %v1035
    %v1037 = vsel %vm672, %v996, %v1036
    %v1038 = vsel %vm674, %v1003, %v1037
    %v1039 = vsel %vm676, %v1010, %v1038
    %v1040 = vsel %vm678, %v1017, %v1039
    %v1041 = vsel %vm293, %v1040, 0
    %1043 = vmatpush.msra.mxu0 0.0
    %1044 = vmatpush.msra.mxu0 0.0
    %1045 = vmatpush.msra.mxu0 0.0
    %1046 = vmatpush.msra.mxu0 0.0
    %1047 = vmatpush.msra.mxu0 0.0
    %1048 = vmatpush.msra.mxu0 0.0
    %1049 = vmatpush.msra.mxu0 0.0
    %1050 = vmatpush.msra.mxu0 0.0
    %1051 = vmatpush.msra.mxu0 0.0
    %1052 = vmatpush.msra.mxu0 0.0
    %1053 = vmatpush.msra.mxu0 0.0
    %1054 = vmatpush.msra.mxu0 0.0
    %1055 = vmatpush.msra.mxu0 %v1024
    %1056 = vmatpush.msra.mxu0 %v1022
    %1057 = vmatpush.msra.mxu0 %v1020
    %1058 = vmatpush.msra.mxu0 %v1018
    %1059 = vmatmul.f32.gmra.mxu0 %v1041
    %v1060 = vpop.f32.mrf.mxu0
    %v1061 = vadd.f32 0.0, %v1060
    %1062 = vdwg.mxu0
    %1063 = vmatpush.msra.mxu0 0.0
    %1064 = vmatpush.msra.mxu0 0.0
    %1065 = vmatpush.msra.mxu0 0.0
    %1066 = vmatpush.msra.mxu0 0.0
    %1067 = vmatpush.msra.mxu0 0.0
    %1068 = vmatpush.msra.mxu0 0.0
    %1069 = vmatpush.msra.mxu0 0.0
    %1070 = vmatpush.msra.mxu0 0.0
    %1071 = vmatpush.msra.mxu0 0.0
    %1072 = vmatpush.msra.mxu0 0.0
    %1073 = vmatpush.msra.mxu0 0.0
    %1074 = vmatpush.msra.mxu0 0.0
    %1075 = vmatpush.msra.mxu0 %v1025
    %1076 = vmatpush.msra.mxu0 %v1023
    %1077 = vmatpush.msra.mxu0 %v1021
    %1078 = vmatpush.msra.mxu0 %v1019
    %1079 = vmatmul.f32.gmra.mxu0 %v1041
    %v1080 = vpop.f32.mrf.mxu0
    %v1081 = vadd.f32 0.0, %v1080
    %1082 = vdwg.mxu0
    %v1083 = vadd.f32 %v527, %v1061
    %v1084 = vadd.f32 %v547, %v1081
    %s1085 = scalar_lea.vmem %s9, 8
    %v1086 = vld [vmem:[%s1085] sm:$0xff]
    %v1087 = vld [vmem:[#allocation6] sm:$0xff]
    %v1088 = vld [vmem:[#allocation6 + $0x8] sm:$0xff]
    %v1089 = vld [vmem:[#allocation6 + $0x10] sm:$0xff]
    %v1090 = vld [vmem:[#allocation6 + $0x18] sm:$0xff]
    %v1091 = vld [vmem:[#allocation6 + $0x20] sm:$0xff]
    %v1092 = vld [vmem:[#allocation6 + $0x28] sm:$0xff]
    %v1093 = vld [vmem:[#allocation6 + $0x30] sm:$0xff]
    %v1094 = vld [vmem:[#allocation6 + $0x38] sm:$0xff]
    %v1096 = vsel %vm293, %v1086, 0
    %1098 = vmatpush.msra.mxu0 0.0
    %1099 = vmatpush.msra.mxu0 0.0
    %1100 = vmatpush.msra.mxu0 0.0
    %1101 = vmatpush.msra.mxu0 0.0
    %1102 = vmatpush.msra.mxu0 0.0
    %1103 = vmatpush.msra.mxu0 0.0
    %1104 = vmatpush.msra.mxu0 0.0
    %1105 = vmatpush.msra.mxu0 0.0
    %1106 = vmatpush.msra.mxu0 0.0
    %1107 = vmatpush.msra.mxu0 0.0
    %1108 = vmatpush.msra.mxu0 0.0
    %1109 = vmatpush.msra.mxu0 0.0
    %1110 = vmatpush.msra.mxu0 %v1093
    %1111 = vmatpush.msra.mxu0 %v1091
    %1112 = vmatpush.msra.mxu0 %v1089
    %1113 = vmatpush.msra.mxu0 %v1087
    %1114 = vmatmul.f32.gmra.mxu0 %v1096
    %v1115 = vpop.f32.mrf.mxu0
    %v1116 = vadd.f32 0.0, %v1115
    %1117 = vdwg.mxu0
    %1118 = vmatpush.msra.mxu0 0.0
    %1119 = vmatpush.msra.mxu0 0.0
    %1120 = vmatpush.msra.mxu0 0.0
    %1121 = vmatpush.msra.mxu0 0.0
    %1122 = vmatpush.msra.mxu0 0.0
    %1123 = vmatpush.msra.mxu0 0.0
    %1124 = vmatpush.msra.mxu0 0.0
    %1125 = vmatpush.msra.mxu0 0.0
    %1126 = vmatpush.msra.mxu0 0.0
    %1127 = vmatpush.msra.mxu0 0.0
    %1128 = vmatpush.msra.mxu0 0.0
    %1129 = vmatpush.msra.mxu0 0.0
    %1130 = vmatpush.msra.mxu0 %v1094
    %1131 = vmatpush.msra.mxu0 %v1092
    %1132 = vmatpush.msra.mxu0 %v1090
    %1133 = vmatpush.msra.mxu0 %v1088
    %1134 = vmatmul.f32.gmra.mxu0 %v1096
    %v1135 = vpop.f32.mrf.mxu0
    %v1136 = vadd.f32 0.0, %v1135
    %1137 = vdwg.mxu0
    %v1138 = vadd.f32 %v1083, %v1116
    %v1139 = vadd.f32 %v1084, %v1136
    %v1140 = vld [vmem:[%s29] sm:$0x3]
    %v1142 = vperm.slane %v1140, 0
    %v1143 = vperm.slane %v1140, 1
    %v1146 = vadd.f32 %v1138, %v1142
    %v1147 = vadd.f32 %v1139, %v1143
    %s1148 = scalar_lea.vmem %s11, 8
    %v1149 = vld [vmem:[%s1148] sm:$0xff]
    %v1150 = vxor.u32 %v1146, 2147483648
    %v1151 = vmul.f32 %v1150, 1.442695
    %v1152 = vpow.pop %v1151
    %v1153 = vadd.f32 %v1152, 1.0
    %v1154 = vrcp.pop %v1153
    %v1155 = vmul.f32 %v1153, %v1154
    %v1156 = vsub.f32 1.0, %v1155
    %v1157 = vmul.f32 %v1154, %v1156
    %v1158 = vadd.f32 %v1154, %v1157
    %vm1159 = vweird.f32 %v1153
    %vm1160 = vweird.f32 %v1154
    %vm1161 = vmor %vm1159, %vm1160
    %v1162 = vsel %vm1161, %v1154, %v1158
    %v1163 = vand.u32 2147483647, %v1153
    %vm1164 = vcmp.eq.f32.partialorder %v1163, 8.507059e+37
    %v1165 = vand.u32 %v1153, 2147483648
    %v1166 = vor.u32 1.1754944e-38, %v1165
    %v1167 = vsel %vm1164, %v1166, %v1162
    %v1168 = vmul.f32 1.0, %v1167
    %1170 = vrot.lane.b32.xlu0 %v1147, 96
    %v1171 = vpop.permute.xlu0 %1170
    %v1173 = vmax.f32 %v1146, %v1171
    %1175 = vrot.lane.b32.xlu0 %v1149, 32
    %v1176 = vpop.permute.xlu0 %1175
    %v1178 = vmul.f32 %v1168, %v1176
    %1180 = vrot.lane.b32.xlu0 %v1173, 32
    %v1181 = vpop.permute.xlu0 %1180
    %v1183 = vmul.f32 %v1168, %v1181
    %1185 = vrot.lane.b32.xlu0 %v1183, 32
    %v1186 = vpop.permute.xlu0 %1185
    %v1188 = vadd.f32 %v1178, %v1186
    %v1189 = vtanh.pop %v1188
    %1191 = vrot.lane.b32.xlu0 %v1189, 32
    %v1192 = vpop.permute.xlu0 %1191
    %v1194 = vmul.f32 %v1168, %v1192
    %1196 = vrot.lane.b32.xlu0 %v1194, 64
    %v1197 = vpop.permute.xlu0 %1196
    %s1199 = scalar_lea.vmem %s59, 8
    %1200 = vst.msk [vmem:[%s1199] sm:$0xff] %vm293, %v1197
    %1202 = vrot.lane.b32.xlu0 %v1188, 96
    %v1203 = vpop.permute.xlu0 %1202
    %s1205 = scalar_lea.vmem %s61, 8
    %1206 = vst.msk [vmem:[%s1205] sm:$0xff] %vm293, %v1203
    %1208 = vrot.lane.b32.xlu0 %v1081, 32
    %v1209 = vpop.permute.xlu0 %1208
    %v1211 = vadd.f32 %v1194, %v1209
    %v1212 = vld [vmem:[%s33] sm:$0x1]
    %v1214 = vperm.slane %v1212, 0
    %1215 = vrot.lane.b32.xlu0 %v1214, 64
    %v1216 = vpop.permute.xlu0 %1215
    %v1218 = vadd.f32 %v1211, %v1216
    %v1219 = vld [vmem:[#allocation7] sm:$0xff]
    %v1220 = vld [vmem:[#allocation7 + $0x8] sm:$0xff]
    %v1221 = vld [vmem:[#allocation7 + $0x10] sm:$0xff]
    %v1222 = vld [vmem:[#allocation7 + $0x18] sm:$0xff]
    %v1223 = vld [vmem:[%s37] sm:$0x1]
    %v1225 = vperm.slane %v1223, 0
    %1228 = vrot.lane.b32.xlu0 %v1218, 64
    %v1229 = vpop.permute.xlu0 %1228
    %v1230 = vsel %vm293, %v1229, 0
    %1232 = vmatpush.msra.mxu0 0.0
    %1233 = vmatpush.msra.mxu0 0.0
    %1234 = vmatpush.msra.mxu0 0.0
    %1235 = vmatpush.msra.mxu0 0.0
    %1236 = vmatpush.msra.mxu0 0.0
    %1237 = vmatpush.msra.mxu0 0.0
    %1238 = vmatpush.msra.mxu0 0.0
    %1239 = vmatpush.msra.mxu0 0.0
    %1240 = vmatpush.msra.mxu0 0.0
    %1241 = vmatpush.msra.mxu0 0.0
    %1242 = vmatpush.msra.mxu0 0.0
    %1243 = vmatpush.msra.mxu0 0.0
    %1244 = vmatpush.msra.mxu0 %v1222
    %1245 = vmatpush.msra.mxu0 %v1221
    %1246 = vmatpush.msra.mxu0 %v1220
    %1247 = vmatpush.msra.mxu0 %v1219
    %1248 = vmatmul.f32.gmra.mxu0 %v1230
    %v1249 = vpop.f32.mrf.mxu0
    %v1250 = vadd.f32 %v1225, %v1249
    %1251 = vdwg.mxu0
    %v1253 = vrot.slane %v1250, 1
    %v1254 = vrot.slane %v1250, 2
    %v1255 = vrot.slane %v1250, 3
    %v1256 = vrot.slane %v1250, 4
    %v1257 = vrot.slane %v1250, 5
    %v1258 = vrot.slane %v1250, 6
    %v1259 = vrot.slane %v1250, 7
    %v1260 = vperm.slane %v1250, 0
    %v1261 = vperm.slane %v1253, 0
    %v1262 = vperm.slane %v1254, 0
    %v1263 = vperm.slane %v1255, 0
    %v1264 = vperm.slane %v1256, 0
    %v1265 = vperm.slane %v1257, 0
    %v1266 = vperm.slane %v1258, 0
    %v1267 = vperm.slane %v1259, 0
    %v1276 = vadd.f32 %v271, %v1260
    %v1277 = vadd.f32 %v272, %v1261
    %v1278 = vadd.f32 %v273, %v1262
    %v1279 = vadd.f32 %v274, %v1263
    %v1280 = vadd.f32 %v275, %v1264
    %v1281 = vadd.f32 %v276, %v1265
    %v1282 = vadd.f32 %v277, %v1266
    %v1283 = vadd.f32 %v278, %v1267
    %v1284 = vtanh.pop %v1276
    %v1285 = vtanh.pop %v1277
    %v1286 = vtanh.pop %v1278
    %v1287 = vtanh.pop %v1279
    %v1288 = vtanh.pop %v1280
    %v1289 = vtanh.pop %v1281
    %v1290 = vtanh.pop %v1282
    %v1291 = vtanh.pop %v1283
    %v1292 = vld [vmem:[%s39] sm:$0x1]
    %v1294 = vperm.slane %v1292, 0
    %v1296 = vmul.f32 %v1284, %v1294
    %v1297 = vmul.f32 %v1285, %v1294
    %v1298 = vmul.f32 %v1286, %v1294
    %v1299 = vmul.f32 %v1287, %v1294
    %v1300 = vmul.f32 %v1288, %v1294
    %v1301 = vmul.f32 %v1289, %v1294
    %v1302 = vmul.f32 %v1290, %v1294
    %v1303 = vmul.f32 %v1291, %v1294
    %v1304 = vsel %vm293, %v1296, 0.0
    %1305 = vadd.xlane.f32.xlu0 %v1304
    %v1306 = vpop.xlane.xlu0 %1305
    %v1307 = vsel %vm293, %v1297, 0.0
    %1308 = vadd.xlane.f32.xlu0 %v1307
    %v1309 = vpop.xlane.xlu0 %1308
    %v1310 = vsel %vm293, %v1298, 0.0
    %1311 = vadd.xlane.f32.xlu0 %v1310
    %v1312 = vpop.xlane.xlu0 %1311
    %v1313 = vsel %vm293, %v1299, 0.0
    %1314 = vadd.xlane.f32.xlu0 %v1313
    %v1315 = vpop.xlane.xlu0 %1314
    %v1316 = vsel %vm293, %v1300, 0.0
    %1317 = vadd.xlane.f32.xlu0 %v1316
    %v1318 = vpop.xlane.xlu0 %1317
    %v1319 = vsel %vm293, %v1301, 0.0
    %1320 = vadd.xlane.f32.xlu0 %v1319
    %v1321 = vpop.xlane.xlu0 %1320
    %v1322 = vsel %vm293, %v1302, 0.0
    %1323 = vadd.xlane.f32.xlu0 %v1322
    %v1324 = vpop.xlane.xlu0 %1323
    %v1325 = vsel %vm293, %v1303, 0.0
    %1326 = vadd.xlane.f32.xlu0 %v1325
    %v1327 = vpop.xlane.xlu0 %1326
    %v1336 = vperm.slane %v1306, %v657
    %v1337 = vperm.slane %v1309, %v657
    %v1338 = vperm.slane %v1312, %v657
    %v1339 = vperm.slane %v1315, %v657
    %v1340 = vperm.slane %v1318, %v657
    %v1341 = vperm.slane %v1321, %v657
    %v1342 = vperm.slane %v1324, %v657
    %v1343 = vperm.slane %v1327, %v657
    %v1344 = vsel %vm666, %v1337, %v1336
    %v1345 = vsel %vm668, %v1338, %v1344
    %v1346 = vsel %vm670, %v1339, %v1345
    %v1347 = vsel %vm672, %v1340, %v1346
    %v1348 = vsel %vm674, %v1341, %v1347
    %v1349 = vsel %vm676, %v1342, %v1348
    %v1350 = vsel %vm678, %v1343, %v1349
    %v1352 = vsel %vm681, %v1350, -inf
    %1353 = vmax.xlane.f32.xlu0 %v1352
    %v1354 = vpop.xlane.xlu0 %1353
    %v1356 = vperm.slane %v1354, 0
    %v1357 = vperm.slane %v1354, 1
    %v1358 = vperm.slane %v1354, 2
    %v1359 = vperm.slane %v1354, 3
    %v1360 = vperm.slane %v1354, 4
    %v1361 = vperm.slane %v1354, 5
    %v1362 = vperm.slane %v1354, 6
    %v1363 = vperm.slane %v1354, 7
    %v1372 = vsub.f32 %v1306, %v1356
    %v1373 = vsub.f32 %v1309, %v1357
    %v1374 = vsub.f32 %v1312, %v1358
    %v1375 = vsub.f32 %v1315, %v1359
    %v1376 = vsub.f32 %v1318, %v1360
    %v1377 = vsub.f32 %v1321, %v1361
    %v1378 = vsub.f32 %v1324, %v1362
    %v1379 = vsub.f32 %v1327, %v1363
    %v1380 = vmul.f32 %v1372, 1.442695
    %v1381 = vpow.pop %v1380
    %v1382 = vmul.f32 %v1373, 1.442695
    %v1383 = vpow.pop %v1382
    %v1384 = vmul.f32 %v1374, 1.442695
    %v1385 = vpow.pop %v1384
    %v1386 = vmul.f32 %v1375, 1.442695
    %v1387 = vpow.pop %v1386
    %v1388 = vmul.f32 %v1376, 1.442695
    %v1389 = vpow.pop %v1388
    %v1390 = vmul.f32 %v1377, 1.442695
    %v1391 = vpow.pop %v1390
    %v1392 = vmul.f32 %v1378, 1.442695
    %v1393 = vpow.pop %v1392
    %v1394 = vmul.f32 %v1379, 1.442695
    %v1395 = vpow.pop %v1394
    %1404 = vset.pattern.permute.xlu0 0
    %1405 = vperm.xlu0 %1404, %v1381
    %v1406 = vpop.permute.xlu0 %1405
    %1407 = vset.pattern.permute.xlu0 0
    %1408 = vperm.xlu0 %1407, %v1383
    %v1409 = vpop.permute.xlu0 %1408
    %1410 = vset.pattern.permute.xlu0 0
    %1411 = vperm.xlu0 %1410, %v1385
    %v1412 = vpop.permute.xlu0 %1411
    %1413 = vset.pattern.permute.xlu0 0
    %1414 = vperm.xlu0 %1413, %v1387
    %v1415 = vpop.permute.xlu0 %1414
    %1416 = vset.pattern.permute.xlu0 0
    %1417 = vperm.xlu0 %1416, %v1389
    %v1418 = vpop.permute.xlu0 %1417
    %1419 = vset.pattern.permute.xlu0 0
    %1420 = vperm.xlu0 %1419, %v1391
    %v1421 = vpop.permute.xlu0 %1420
    %1422 = vset.pattern.permute.xlu0 0
    %1423 = vperm.xlu0 %1422, %v1393
    %v1424 = vpop.permute.xlu0 %1423
    %1425 = vset.pattern.permute.xlu0 0
    %1426 = vperm.xlu0 %1425, %v1395
    %v1427 = vpop.permute.xlu0 %1426
    %v1428 = vperm.slane %v1406, %v657
    %v1429 = vperm.slane %v1409, %v657
    %v1430 = vperm.slane %v1412, %v657
    %v1431 = vperm.slane %v1415, %v657
    %v1432 = vperm.slane %v1418, %v657
    %v1433 = vperm.slane %v1421, %v657
    %v1434 = vperm.slane %v1424, %v657
    %v1435 = vperm.slane %v1427, %v657
    %v1436 = vsel %vm666, %v1429, %v1428
    %v1437 = vsel %vm668, %v1430, %v1436
    %v1438 = vsel %vm670, %v1431, %v1437
    %v1439 = vsel %vm672, %v1432, %v1438
    %v1440 = vsel %vm674, %v1433, %v1439
    %v1441 = vsel %vm676, %v1434, %v1440
    %v1442 = vsel %vm678, %v1435, %v1441
    %v1444 = vsel %vm681, %v1442, 0.0
    %1445 = vadd.xlane.f32.xlu0 %v1444
    %v1446 = vpop.xlane.xlu0 %1445
    %v1448 = vperm.slane %v1446, 0
    %v1449 = vperm.slane %v1446, 1
    %v1450 = vperm.slane %v1446, 2
    %v1451 = vperm.slane %v1446, 3
    %v1452 = vperm.slane %v1446, 4
    %v1453 = vperm.slane %v1446, 5
    %v1454 = vperm.slane %v1446, 6
    %v1455 = vperm.slane %v1446, 7
    %v1464 = vrcp.pop %v1448
    %v1465 = vmul.f32 %v1448, %v1464
    %v1466 = vsub.f32 1.0, %v1465
    %v1467 = vmul.f32 %v1464, %v1466
    %v1468 = vadd.f32 %v1464, %v1467
    %vm1469 = vweird.f32 %v1448
    %vm1470 = vweird.f32 %v1464
    %vm1471 = vmor %vm1469, %vm1470
    %v1472 = vsel %vm1471, %v1464, %v1468
    %v1473 = vand.u32 2147483647, %v1448
    %vm1474 = vcmp.eq.f32.partialorder %v1473, 8.507059e+37
    %v1475 = vand.u32 %v1448, 2147483648
    %v1476 = vor.u32 1.1754944e-38, %v1475
    %v1477 = vsel %vm1474, %v1476, %v1472
    %v1478 = vmul.f32 %v1381, %v1477
    %v1479 = vrcp.pop %v1449
    %v1480 = vmul.f32 %v1449, %v1479
    %v1481 = vsub.f32 1.0, %v1480
    %v1482 = vmul.f32 %v1479, %v1481
    %v1483 = vadd.f32 %v1479, %v1482
    %vm1484 = vweird.f32 %v1449
    %vm1485 = vweird.f32 %v1479
    %vm1486 = vmor %vm1484, %vm1485
    %v1487 = vsel %vm1486, %v1479, %v1483
    %v1488 = vand.u32 2147483647, %v1449
    %vm1489 = vcmp.eq.f32.partialorder %v1488, 8.507059e+37
    %v1490 = vand.u32 %v1449, 2147483648
    %v1491 = vor.u32 1.1754944e-38, %v1490
    %v1492 = vsel %vm1489, %v1491, %v1487
    %v1493 = vmul.f32 %v1383, %v1492
    %v1494 = vrcp.pop %v1450
    %v1495 = vmul.f32 %v1450, %v1494
    %v1496 = vsub.f32 1.0, %v1495
    %v1497 = vmul.f32 %v1494, %v1496
    %v1498 = vadd.f32 %v1494, %v1497
    %vm1499 = vweird.f32 %v1450
    %vm1500 = vweird.f32 %v1494
    %vm1501 = vmor %vm1499, %vm1500
    %v1502 = vsel %vm1501, %v1494, %v1498
    %v1503 = vand.u32 2147483647, %v1450
    %vm1504 = vcmp.eq.f32.partialorder %v1503, 8.507059e+37
    %v1505 = vand.u32 %v1450, 2147483648
    %v1506 = vor.u32 1.1754944e-38, %v1505
    %v1507 = vsel %vm1504, %v1506, %v1502
    %v1508 = vmul.f32 %v1385, %v1507
    %v1509 = vrcp.pop %v1451
    %v1510 = vmul.f32 %v1451, %v1509
    %v1511 = vsub.f32 1.0, %v1510
    %v1512 = vmul.f32 %v1509, %v1511
    %v1513 = vadd.f32 %v1509, %v1512
    %vm1514 = vweird.f32 %v1451
    %vm1515 = vweird.f32 %v1509
    %vm1516 = vmor %vm1514, %vm1515
    %v1517 = vsel %vm1516, %v1509, %v1513
    %v1518 = vand.u32 2147483647, %v1451
    %vm1519 = vcmp.eq.f32.partialorder %v1518, 8.507059e+37
    %v1520 = vand.u32 %v1451, 2147483648
    %v1521 = vor.u32 1.1754944e-38, %v1520
    %v1522 = vsel %vm1519, %v1521, %v1517
    %v1523 = vmul.f32 %v1387, %v1522
    %v1524 = vrcp.pop %v1452
    %v1525 = vmul.f32 %v1452, %v1524
    %v1526 = vsub.f32 1.0, %v1525
    %v1527 = vmul.f32 %v1524, %v1526
    %v1528 = vadd.f32 %v1524, %v1527
    %vm1529 = vweird.f32 %v1452
    %vm1530 = vweird.f32 %v1524
    %vm1531 = vmor %vm1529, %vm1530
    %v1532 = vsel %vm1531, %v1524, %v1528
    %v1533 = vand.u32 2147483647, %v1452
    %vm1534 = vcmp.eq.f32.partialorder %v1533, 8.507059e+37
    %v1535 = vand.u32 %v1452, 2147483648
    %v1536 = vor.u32 1.1754944e-38, %v1535
    %v1537 = vsel %vm1534, %v1536, %v1532
    %v1538 = vmul.f32 %v1389, %v1537
    %v1539 = vrcp.pop %v1453
    %v1540 = vmul.f32 %v1453, %v1539
    %v1541 = vsub.f32 1.0, %v1540
    %v1542 = vmul.f32 %v1539, %v1541
    %v1543 = vadd.f32 %v1539, %v1542
    %vm1544 = vweird.f32 %v1453
    %vm1545 = vweird.f32 %v1539
    %vm1546 = vmor %vm1544, %vm1545
    %v1547 = vsel %vm1546, %v1539, %v1543
    %v1548 = vand.u32 2147483647, %v1453
    %vm1549 = vcmp.eq.f32.partialorder %v1548, 8.507059e+37
    %v1550 = vand.u32 %v1453, 2147483648
    %v1551 = vor.u32 1.1754944e-38, %v1550
    %v1552 = vsel %vm1549, %v1551, %v1547
    %v1553 = vmul.f32 %v1391, %v1552
    %v1554 = vrcp.pop %v1454
    %v1555 = vmul.f32 %v1454, %v1554
    %v1556 = vsub.f32 1.0, %v1555
    %v1557 = vmul.f32 %v1554, %v1556
    %v1558 = vadd.f32 %v1554, %v1557
    %vm1559 = vweird.f32 %v1454
    %vm1560 = vweird.f32 %v1554
    %vm1561 = vmor %vm1559, %vm1560
    %v1562 = vsel %vm1561, %v1554, %v1558
    %v1563 = vand.u32 2147483647, %v1454
    %vm1564 = vcmp.eq.f32.partialorder %v1563, 8.507059e+37
    %v1565 = vand.u32 %v1454, 2147483648
    %v1566 = vor.u32 1.1754944e-38, %v1565
    %v1567 = vsel %vm1564, %v1566, %v1562
    %v1568 = vmul.f32 %v1393, %v1567
    %v1569 = vrcp.pop %v1455
    %v1570 = vmul.f32 %v1455, %v1569
    %v1571 = vsub.f32 1.0, %v1570
    %v1572 = vmul.f32 %v1569, %v1571
    %v1573 = vadd.f32 %v1569, %v1572
    %vm1574 = vweird.f32 %v1455
    %vm1575 = vweird.f32 %v1569
    %vm1576 = vmor %vm1574, %vm1575
    %v1577 = vsel %vm1576, %v1569, %v1573
    %v1578 = vand.u32 2147483647, %v1455
    %vm1579 = vcmp.eq.f32.partialorder %v1578, 8.507059e+37
    %v1580 = vand.u32 %v1455, 2147483648
    %v1581 = vor.u32 1.1754944e-38, %v1580
    %v1582 = vsel %vm1579, %v1581, %v1577
    %v1583 = vmul.f32 %v1395, %v1582
    %1585 = vset.pattern.permute.xlu0 0
    %1586 = vperm.xlu0 %1585, %v1478
    %v1587 = vpop.permute.xlu0 %1586
    %1590 = vset.pattern.permute.xlu0 0
    %1591 = vperm.xlu0 %1590, %v1493
    %v1592 = vpop.permute.xlu0 %1591
    %1595 = vset.pattern.permute.xlu0 0
    %1596 = vperm.xlu0 %1595, %v1508
    %v1597 = vpop.permute.xlu0 %1596
    %1600 = vset.pattern.permute.xlu0 0
    %1601 = vperm.xlu0 %1600, %v1523
    %v1602 = vpop.permute.xlu0 %1601
    %1605 = vset.pattern.permute.xlu0 0
    %1606 = vperm.xlu0 %1605, %v1538
    %v1607 = vpop.permute.xlu0 %1606
    %1610 = vset.pattern.permute.xlu0 0
    %1611 = vperm.xlu0 %1610, %v1553
    %v1612 = vpop.permute.xlu0 %1611
    %1615 = vset.pattern.permute.xlu0 0
    %1616 = vperm.xlu0 %1615, %v1568
    %v1617 = vpop.permute.xlu0 %1616
    %1620 = vset.pattern.permute.xlu0 0
    %1621 = vperm.xlu0 %1620, %v1583
    %v1622 = vpop.permute.xlu0 %1621
    %v1624 = vmul.f32 %v1587, %v263
    %v1625 = vmul.f32 %v1592, %v264
    %v1626 = vmul.f32 %v1597, %v265
    %v1627 = vmul.f32 %v1602, %v266
    %v1628 = vmul.f32 %v1607, %v267
    %v1629 = vmul.f32 %v1612, %v268
    %v1630 = vmul.f32 %v1617, %v269
    %v1631 = vmul.f32 %v1622, %v270
    %v1632 = vsel %vm293, %v1624, 0.0
    %v1633 = vrot.slane %v1632, 4
    %v1634 = vadd.f32 %v1632, %v1633
    %v1635 = vrot.slane %v1634, 2
    %v1636 = vadd.f32 %v1634, %v1635
    %v1637 = vrot.slane %v1636, 1
    %v1638 = vadd.f32 %v1636, %v1637
    %v1639 = vsel %vm293, %v1625, 0.0
    %v1640 = vrot.slane %v1639, 4
    %v1641 = vadd.f32 %v1639, %v1640
    %v1642 = vrot.slane %v1641, 2
    %v1643 = vadd.f32 %v1641, %v1642
    %v1644 = vrot.slane %v1643, 1
    %v1645 = vadd.f32 %v1643, %v1644
    %v1646 = vsel %vm293, %v1626, 0.0
    %v1647 = vrot.slane %v1646, 4
    %v1648 = vadd.f32 %v1646, %v1647
    %v1649 = vrot.slane %v1648, 2
    %v1650 = vadd.f32 %v1648, %v1649
    %v1651 = vrot.slane %v1650, 1
    %v1652 = vadd.f32 %v1650, %v1651
    %v1653 = vsel %vm293, %v1627, 0.0
    %v1654 = vrot.slane %v1653, 4
    %v1655 = vadd.f32 %v1653, %v1654
    %v1656 = vrot.slane %v1655, 2
    %v1657 = vadd.f32 %v1655, %v1656
    %v1658 = vrot.slane %v1657, 1
    %v1659 = vadd.f32 %v1657, %v1658
    %v1660 = vsel %vm293, %v1628, 0.0
    %v1661 = vrot.slane %v1660, 4
    %v1662 = vadd.f32 %v1660, %v1661
    %v1663 = vrot.slane %v1662, 2
    %v1664 = vadd.f32 %v1662, %v1663
    %v1665 = vrot.slane %v1664, 1
    %v1666 = vadd.f32 %v1664, %v1665
    %v1667 = vsel %vm293, %v1629, 0.0
    %v1668 = vrot.slane %v1667, 4
    %v1669 = vadd.f32 %v1667, %v1668
    %v1670 = vrot.slane %v1669, 2
    %v1671 = vadd.f32 %v1669, %v1670
    %v1672 = vrot.slane %v1671, 1
    %v1673 = vadd.f32 %v1671, %v1672
    %v1674 = vsel %vm293, %v1630, 0.0
    %v1675 = vrot.slane %v1674, 4
    %v1676 = vadd.f32 %v1674, %v1675
    %v1677 = vrot.slane %v1676, 2
    %v1678 = vadd.f32 %v1676, %v1677
    %v1679 = vrot.slane %v1678, 1
    %v1680 = vadd.f32 %v1678, %v1679
    %v1681 = vsel %vm293, %v1631, 0.0
    %v1682 = vrot.slane %v1681, 4
    %v1683 = vadd.f32 %v1681, %v1682
    %v1684 = vrot.slane %v1683, 2
    %v1685 = vadd.f32 %v1683, %v1684
    %v1686 = vrot.slane %v1685, 1
    %v1687 = vadd.f32 %v1685, %v1686
    %v1688 = vld [vmem:[#allocation9] sm:$0xff]
    %v1689 = vld [vmem:[#allocation9 + $0x8] sm:$0xff]
    %v1690 = vld [vmem:[#allocation9 + $0x10] sm:$0xff]
    %v1691 = vld [vmem:[#allocation9 + $0x18] sm:$0xff]
    %v1692 = vsel %vm293, %v1197, 0
    %1694 = vmatpush.msra.mxu0 0.0
    %1695 = vmatpush.msra.mxu0 0.0
    %1696 = vmatpush.msra.mxu0 0.0
    %1697 = vmatpush.msra.mxu0 0.0
    %1698 = vmatpush.msra.mxu0 0.0
    %1699 = vmatpush.msra.mxu0 0.0
    %1700 = vmatpush.msra.mxu0 0.0
    %1701 = vmatpush.msra.mxu0 0.0
    %1702 = vmatpush.msra.mxu0 0.0
    %1703 = vmatpush.msra.mxu0 0.0
    %1704 = vmatpush.msra.mxu0 0.0
    %1705 = vmatpush.msra.mxu0 0.0
    %1706 = vmatpush.msra.mxu0 %v1691
    %1707 = vmatpush.msra.mxu0 %v1690
    %1708 = vmatpush.msra.mxu0 %v1689
    %1709 = vmatpush.msra.mxu0 %v1688
    %1710 = vmatmul.f32.gmra.mxu0 %v1692
    %v1711 = vpop.f32.mrf.mxu0
    %v1712 = vadd.f32 0.0, %v1711
    %1713 = vdwg.mxu0
    %1715 = vrot.lane.b32.xlu0 %v1712, 32
    %v1716 = vpop.permute.xlu0 %1715
    %v1718 = vadd.f32 %v547, %v1716
    %v1719 = vld [vmem:[%s43] sm:$0x1]
    %v1721 = vperm.slane %v1719, 0
    %1722 = vrot.lane.b32.xlu0 %v1721, 32
    %v1723 = vpop.permute.xlu0 %1722
    %v1725 = vadd.f32 %v1718, %v1723
    %v1726 = vmax.f32 %v1725, 0.0
    %v1727 = vld [vmem:[#allocation10] sm:$0xff]
    %v1728 = vld [vmem:[#allocation10 + $0x8] sm:$0xff]
    %v1729 = vld [vmem:[#allocation10 + $0x10] sm:$0xff]
    %v1730 = vld [vmem:[#allocation10 + $0x18] sm:$0xff]
    %v1731 = vld [vmem:[#allocation10 + $0x20] sm:$0xff]
    %v1732 = vld [vmem:[#allocation10 + $0x28] sm:$0xff]
    %v1733 = vld [vmem:[#allocation10 + $0x30] sm:$0xff]
    %v1734 = vld [vmem:[#allocation10 + $0x38] sm:$0xff]
    %v1735 = vld [vmem:[#allocation12] sm:$0xff]
    %v1736 = vld [vmem:[#allocation12 + $0x8] sm:$0xff]
    %v1737 = vld [vmem:[#allocation12 + $0x10] sm:$0xff]
    %v1738 = vld [vmem:[#allocation12 + $0x18] sm:$0xff]
    %v1739 = vld [vmem:[#allocation12 + $0x20] sm:$0xff]
    %v1740 = vld [vmem:[#allocation12 + $0x28] sm:$0xff]
    %v1741 = vld [vmem:[#allocation12 + $0x30] sm:$0xff]
    %v1742 = vld [vmem:[#allocation12 + $0x38] sm:$0xff]
    %v1751 = vsel %vm666, %v1645, %v1638
    %v1752 = vsel %vm668, %v1652, %v1751
    %v1753 = vsel %vm670, %v1659, %v1752
    %v1754 = vsel %vm672, %v1666, %v1753
    %v1755 = vsel %vm674, %v1673, %v1754
    %v1756 = vsel %vm676, %v1680, %v1755
    %v1757 = vsel %vm678, %v1687, %v1756
    %v1758 = vsel %vm293, %v1757, 0
    %1760 = vmatpush.msra.mxu0 0.0
    %1761 = vmatpush.msra.mxu0 0.0
    %1762 = vmatpush.msra.mxu0 0.0
    %1763 = vmatpush.msra.mxu0 0.0
    %1764 = vmatpush.msra.mxu0 0.0
    %1765 = vmatpush.msra.mxu0 0.0
    %1766 = vmatpush.msra.mxu0 0.0
    %1767 = vmatpush.msra.mxu0 0.0
    %1768 = vmatpush.msra.mxu0 0.0
    %1769 = vmatpush.msra.mxu0 0.0
    %1770 = vmatpush.msra.mxu0 0.0
    %1771 = vmatpush.msra.mxu0 0.0
    %1772 = vmatpush.msra.mxu0 %v1741
    %1773 = vmatpush.msra.mxu0 %v1739
    %1774 = vmatpush.msra.mxu0 %v1737
    %1775 = vmatpush.msra.mxu0 %v1735
    %1776 = vmatmul.f32.gmra.mxu0 %v1758
    %v1777 = vpop.f32.mrf.mxu0
    %v1778 = vadd.f32 0.0, %v1777
    %1779 = vdwg.mxu0
    %1780 = vmatpush.msra.mxu0 0.0
    %1781 = vmatpush.msra.mxu0 0.0
    %1782 = vmatpush.msra.mxu0 0.0
    %1783 = vmatpush.msra.mxu0 0.0
    %1784 = vmatpush.msra.mxu0 0.0
    %1785 = vmatpush.msra.mxu0 0.0
    %1786 = vmatpush.msra.mxu0 0.0
    %1787 = vmatpush.msra.mxu0 0.0
    %1788 = vmatpush.msra.mxu0 0.0
    %1789 = vmatpush.msra.mxu0 0.0
    %1790 = vmatpush.msra.mxu0 0.0
    %1791 = vmatpush.msra.mxu0 0.0
    %1792 = vmatpush.msra.mxu0 %v1742
    %1793 = vmatpush.msra.mxu0 %v1740
    %1794 = vmatpush.msra.mxu0 %v1738
    %1795 = vmatpush.msra.mxu0 %v1736
    %1796 = vmatmul.f32.gmra.mxu0 %v1758
    %v1797 = vpop.f32.mrf.mxu0
    %v1798 = vadd.f32 0.0, %v1797
    %1799 = vdwg.mxu0
    %1801 = vrot.lane.b32.xlu0 %v1726, 96
    %v1802 = vpop.permute.xlu0 %1801
    %v1803 = vsel %vm293, %v1802, 0
    %1805 = vmatpush.msra.mxu0 0.0
    %1806 = vmatpush.msra.mxu0 0.0
    %1807 = vmatpush.msra.mxu0 0.0
    %1808 = vmatpush.msra.mxu0 0.0
    %1809 = vmatpush.msra.mxu0 0.0
    %1810 = vmatpush.msra.mxu0 0.0
    %1811 = vmatpush.msra.mxu0 0.0
    %1812 = vmatpush.msra.mxu0 0.0
    %1813 = vmatpush.msra.mxu0 0.0
    %1814 = vmatpush.msra.mxu0 0.0
    %1815 = vmatpush.msra.mxu0 0.0
    %1816 = vmatpush.msra.mxu0 0.0
    %1817 = vmatpush.msra.mxu0 %v1733
    %1818 = vmatpush.msra.mxu0 %v1731
    %1819 = vmatpush.msra.mxu0 %v1729
    %1820 = vmatpush.msra.mxu0 %v1727
    %1821 = vmatmul.f32.gmra.mxu0 %v1803
    %v1822 = vpop.f32.mrf.mxu0
    %v1823 = vadd.f32 %v1778, %v1822
    %1824 = vdwg.mxu0
    %1825 = vmatpush.msra.mxu0 0.0
    %1826 = vmatpush.msra.mxu0 0.0
    %1827 = vmatpush.msra.mxu0 0.0
    %1828 = vmatpush.msra.mxu0 0.0
    %1829 = vmatpush.msra.mxu0 0.0
    %1830 = vmatpush.msra.mxu0 0.0
    %1831 = vmatpush.msra.mxu0 0.0
    %1832 = vmatpush.msra.mxu0 0.0
    %1833 = vmatpush.msra.mxu0 0.0
    %1834 = vmatpush.msra.mxu0 0.0
    %1835 = vmatpush.msra.mxu0 0.0
    %1836 = vmatpush.msra.mxu0 0.0
    %1837 = vmatpush.msra.mxu0 %v1734
    %1838 = vmatpush.msra.mxu0 %v1732
    %1839 = vmatpush.msra.mxu0 %v1730
    %1840 = vmatpush.msra.mxu0 %v1728
    %1841 = vmatmul.f32.gmra.mxu0 %v1803
    %v1842 = vpop.f32.mrf.mxu0
    %v1843 = vadd.f32 %v1798, %v1842
    %1844 = vdwg.mxu0
    %s1845 = scalar_lea.vmem %s9, 16
    %v1846 = vld [vmem:[%s1845] sm:$0xff]
    %v1847 = vld [vmem:[#allocation13] sm:$0xff]
    %v1848 = vld [vmem:[#allocation13 + $0x8] sm:$0xff]
    %v1849 = vld [vmem:[#allocation13 + $0x10] sm:$0xff]
    %v1850 = vld [vmem:[#allocation13 + $0x18] sm:$0xff]
    %v1851 = vld [vmem:[#allocation13 + $0x20] sm:$0xff]
    %v1852 = vld [vmem:[#allocation13 + $0x28] sm:$0xff]
    %v1853 = vld [vmem:[#allocation13 + $0x30] sm:$0xff]
    %v1854 = vld [vmem:[#allocation13 + $0x38] sm:$0xff]
    %v1856 = vsel %vm293, %v1846, 0
    %1858 = vmatpush.msra.mxu0 0.0
    %1859 = vmatpush.msra.mxu0 0.0
    %1860 = vmatpush.msra.mxu0 0.0
    %1861 = vmatpush.msra.mxu0 0.0
    %1862 = vmatpush.msra.mxu0 0.0
    %1863 = vmatpush.msra.mxu0 0.0
    %1864 = vmatpush.msra.mxu0 0.0
    %1865 = vmatpush.msra.mxu0 0.0
    %1866 = vmatpush.msra.mxu0 0.0
    %1867 = vmatpush.msra.mxu0 0.0
    %1868 = vmatpush.msra.mxu0 0.0
    %1869 = vmatpush.msra.mxu0 0.0
    %1870 = vmatpush.msra.mxu0 %v1853
    %1871 = vmatpush.msra.mxu0 %v1851
    %1872 = vmatpush.msra.mxu0 %v1849
    %1873 = vmatpush.msra.mxu0 %v1847
    %1874 = vmatmul.f32.gmra.mxu0 %v1856
    %v1875 = vpop.f32.mrf.mxu0
    %v1876 = vadd.f32 0.0, %v1875
    %1877 = vdwg.mxu0
    %1878 = vmatpush.msra.mxu0 0.0
    %1879 = vmatpush.msra.mxu0 0.0
    %1880 = vmatpush.msra.mxu0 0.0
    %1881 = vmatpush.msra.mxu0 0.0
    %1882 = vmatpush.msra.mxu0 0.0
    %1883 = vmatpush.msra.mxu0 0.0
    %1884 = vmatpush.msra.mxu0 0.0
    %1885 = vmatpush.msra.mxu0 0.0
    %1886 = vmatpush.msra.mxu0 0.0
    %1887 = vmatpush.msra.mxu0 0.0
    %1888 = vmatpush.msra.mxu0 0.0
    %1889 = vmatpush.msra.mxu0 0.0
    %1890 = vmatpush.msra.mxu0 %v1854
    %1891 = vmatpush.msra.mxu0 %v1852
    %1892 = vmatpush.msra.mxu0 %v1850
    %1893 = vmatpush.msra.mxu0 %v1848
    %1894 = vmatmul.f32.gmra.mxu0 %v1856
    %v1895 = vpop.f32.mrf.mxu0
    %v1896 = vadd.f32 0.0, %v1895
    %1897 = vdwg.mxu0
    %v1898 = vadd.f32 %v1823, %v1876
    %v1899 = vadd.f32 %v1843, %v1896
    %v1900 = vld [vmem:[%s49] sm:$0x3]
    %v1902 = vperm.slane %v1900, 0
    %v1903 = vperm.slane %v1900, 1
    %v1906 = vadd.f32 %v1898, %v1902
    %v1907 = vadd.f32 %v1899, %v1903
    %s1908 = scalar_lea.vmem %s11, 16
    %v1909 = vld [vmem:[%s1908] sm:$0xff]
    %v1910 = vxor.u32 %v1906, 2147483648
    %v1911 = vmul.f32 %v1910, 1.442695
    %v1912 = vpow.pop %v1911
    %v1913 = vadd.f32 %v1912, 1.0
    %v1914 = vrcp.pop %v1913
    %v1915 = vmul.f32 %v1913, %v1914
    %v1916 = vsub.f32 1.0, %v1915
    %v1917 = vmul.f32 %v1914, %v1916
    %v1918 = vadd.f32 %v1914, %v1917
    %vm1919 = vweird.f32 %v1913
    %vm1920 = vweird.f32 %v1914
    %vm1921 = vmor %vm1919, %vm1920
    %v1922 = vsel %vm1921, %v1914, %v1918
    %v1923 = vand.u32 2147483647, %v1913
    %vm1924 = vcmp.eq.f32.partialorder %v1923, 8.507059e+37
    %v1925 = vand.u32 %v1913, 2147483648
    %v1926 = vor.u32 1.1754944e-38, %v1925
    %v1927 = vsel %vm1924, %v1926, %v1922
    %v1928 = vmul.f32 1.0, %v1927
    %1930 = vrot.lane.b32.xlu0 %v1907, 96
    %v1931 = vpop.permute.xlu0 %1930
    %v1933 = vmax.f32 %v1906, %v1931
    %1935 = vrot.lane.b32.xlu0 %v1909, 32
    %v1936 = vpop.permute.xlu0 %1935
    %v1938 = vmul.f32 %v1928, %v1936
    %1940 = vrot.lane.b32.xlu0 %v1933, 32
    %v1941 = vpop.permute.xlu0 %1940
    %v1943 = vmul.f32 %v1928, %v1941
    %1945 = vrot.lane.b32.xlu0 %v1943, 32
    %v1946 = vpop.permute.xlu0 %1945
    %v1948 = vadd.f32 %v1938, %v1946
    %v1949 = vtanh.pop %v1948
    %1951 = vrot.lane.b32.xlu0 %v1949, 32
    %v1952 = vpop.permute.xlu0 %1951
    %v1954 = vmul.f32 %v1928, %v1952
    %1956 = vrot.lane.b32.xlu0 %v1954, 64
    %v1957 = vpop.permute.xlu0 %1956
    %s1959 = scalar_lea.vmem %s59, 16
    %1960 = vst.msk [vmem:[%s1959] sm:$0xff] %vm293, %v1957
    %1962 = vrot.lane.b32.xlu0 %v1948, 96
    %v1963 = vpop.permute.xlu0 %1962
    %s1965 = scalar_lea.vmem %s61, 16
    %1966 = vst.msk [vmem:[%s1965] sm:$0xff] %vm293, %v1963
    %v1967 = vld [vmem:[#allocation15] sm:$0xff]
    %v1968 = vld [vmem:[#allocation15 + $0x8] sm:$0xff]
    %v1969 = vld [vmem:[#allocation15 + $0x10] sm:$0xff]
    %v1970 = vld [vmem:[#allocation15 + $0x18] sm:$0xff]
    %v1971 = vsel %vm293, %v1957, 0
    %1973 = vmatpush.msra.mxu0 0.0
    %1974 = vmatpush.msra.mxu0 0.0
    %1975 = vmatpush.msra.mxu0 0.0
    %1976 = vmatpush.msra.mxu0 0.0
    %1977 = vmatpush.msra.mxu0 0.0
    %1978 = vmatpush.msra.mxu0 0.0
    %1979 = vmatpush.msra.mxu0 0.0
    %1980 = vmatpush.msra.mxu0 0.0
    %1981 = vmatpush.msra.mxu0 0.0
    %1982 = vmatpush.msra.mxu0 0.0
    %1983 = vmatpush.msra.mxu0 0.0
    %1984 = vmatpush.msra.mxu0 0.0
    %1985 = vmatpush.msra.mxu0 %v1970
    %1986 = vmatpush.msra.mxu0 %v1969
    %1987 = vmatpush.msra.mxu0 %v1968
    %1988 = vmatpush.msra.mxu0 %v1967
    %1989 = vmatmul.f32.gmra.mxu0 %v1971
    %v1990 = vpop.f32.mrf.mxu0
    %v1991 = vadd.f32 0.0, %v1990
    %1992 = vdwg.mxu0
    %1994 = vrot.lane.b32.xlu0 %v1991, 64
    %v1995 = vpop.permute.xlu0 %1994
    %v1997 = vadd.f32 %v1718, %v1995
    %v1998 = vld [vmem:[%s55] sm:$0x1]
    %v2000 = vperm.slane %v1998, 0
    %2001 = vrot.lane.b32.xlu0 %v2000, 64
    %v2002 = vpop.permute.xlu0 %2001
    %v2004 = vadd.f32 %v1997, %v2002
    %v2005 = vmax.f32 %v2004, 0.0
    %2007 = vrot.lane.b32.xlu0 %v2005, 64
    %v2008 = vpop.permute.xlu0 %2007
    %2010 = vst.msk [vmem:[%s57] sm:$0xff] %vm293, %v2008
    // Predicated region
    $region150: #{dense_att_core_forward.1} parent=1 // pred_check
      _
    $region151: #{dense_att_core_forward.1} parent=1 // pred_check_branch
      %2012 = sbr.rel (0) target = $region153
    $region152: #{dense_att_core_forward.1} parent=1 // pred_region
      _
    $region153: #{dense_att_core_forward.1} parent=1 // pred_fallthru
      _
    // Predicated region
    $region154: #{dense_att_core_forward.1} parent=1 // pred_check
      _
    $region155: #{dense_att_core_forward.1} parent=1 // pred_check_branch
      %2014 = sbr.rel (0) target = $region157
    $region156: #{dense_att_core_forward.1} parent=1 // pred_region
      _
    $region157: #{dense_att_core_forward.1} parent=1 // pred_fallthru
      _
    // Predicated region
    $region158: #{dense_att_core_forward.1} parent=1 // pred_check
      _
    $region159: #{dense_att_core_forward.1} parent=1 // pred_check_branch
      %2016 = sbr.rel (0) target = $region161
    $region160: #{dense_att_core_forward.1} parent=1 // pred_region
      _
    $region161: #{dense_att_core_forward.1} parent=1 // pred_fallthru
      _
    // Predicated region
    $region162: #{dense_att_core_forward.1} parent=1 // pred_check
      _
    $region163: #{dense_att_core_forward.1} parent=1 // pred_check_branch
      %2018 = sbr.rel (0) target = $region165
    $region164: #{dense_att_core_forward.1} parent=1 // pred_region
      _
    $region165: #{dense_att_core_forward.1} parent=1 // pred_fallthru
      _
    // Predicated region
    $region166: #{dense_att_core_forward.1} parent=1 // pred_check
      _
    $region167: #{dense_att_core_forward.1} parent=1 // pred_check_branch
      %2020 = sbr.rel (0) target = $region169
    $region168: #{dense_att_core_forward.1} parent=1 // pred_region
      _
    $region169: #{dense_att_core_forward.1} parent=1 // pred_fallthru
      _
    // Predicated region
    $region170: #{dense_att_core_forward.1} parent=1 // pred_check
      _
    $region171: #{dense_att_core_forward.1} parent=1 // pred_check_branch
      %2022 = sbr.rel (0) target = $region173
    $region172: #{dense_att_core_forward.1} parent=1 // pred_region
      _
    $region173: #{dense_att_core_forward.1} parent=1 // pred_fallthru
      _
    %2023 = vsyncpa [#allocation3], 1
    %2024 = vsyncpa [#allocation5], 1
    %2025 = vsyncpa [#allocation8], 1
    %2026 = vsyncpa [#allocation11], 1
    %2027 = vsyncpa [#allocation14], 1

</llo_original>
